<compile_context>
chip_gen: v7x
topology: tpu7x:2x2x1
jax: 0.10.0
libtpu: 0.0.40
codegen_flags: <defaults>
</compile_context>

<pallas_src>
import functools

import jax
import jax.numpy as jnp
from jax.experimental import pallas as pl
from jax.experimental.pallas import tpu as pltpu


def _convblock_kernel(x_ref, w_ref, b_ref, o_ref, *,
                      tile_h, wo, cin, cout, kh, kw, sh, sw, activate):
    # x_ref: (1, Hp, Wp, Cin)   full padded feature map of one batch element
    # w_ref: (kh*kw*Cin, Cout)  HWIO weights flattened over (i, j, c)
    # b_ref: (1, Cout)
    # o_ref: (1, tile_h, Wo, Cout)
    h = pl.program_id(1)
    span_h = (tile_h - 1) * sh + kh
    row0 = pl.multiple_of(h * (tile_h * sh), tile_h * sh)
    x = x_ref[0, pl.ds(row0, span_h), :, :]            # (span_h, Wp, Cin)

    # im2col: gather the kh*kw shifted taps; feature order (i, j, c) matches
    # the flattened HWIO weight.  One concat + one MXU matmul replaces the
    # previous per-tap einsums with K=Cin=4.
    parts = []
    for i in range(kh):
        for j in range(kw):
            # TODO(synk): for stride > 1 this strided VMEM slice relayouts via
            # the XLU; a production kernel would pre-stride at DMA time
            # (pl.ds(..., stride=sh) on the ref / halo DMA into scratch).
            parts.append(jax.lax.slice(
                x, (i, j, 0),
                (i + (tile_h - 1) * sh + 1, j + (wo - 1) * sw + 1, cin),
                (sh, sw, 1)))                          # (tile_h, Wo, Cin)
    patches = jnp.concatenate(parts, axis=-1)          # (tile_h, Wo, kh*kw*Cin)
    patches = patches.reshape(tile_h * wo, kh * kw * cin)

    # Single matmul: operands in native dtype, f32 accumulation on the MXU.
    acc = jnp.dot(patches, w_ref[...], preferred_element_type=jnp.float32)
    acc = acc + b_ref[...].astype(jnp.float32)         # (tile_h*Wo, Cout)
    if activate:
        acc = jnp.where(acc > 0, acc, 0.2 * acc)       # LeakyReLU(0.2)

    o_ref[0] = acc.reshape(tile_h, wo, cout).astype(o_ref.dtype)


def _pick_tile_h(ho, cap=128):
    """Largest multiple-of-8 divisor of `ho` that is <= min(cap, ho // 2).

    Multiple-of-8 keeps the output tile sublane-aligned; <= ho // 2 guarantees
    at least two grid steps along H so the pipeline has DMAs to overlap.
    Falls back to a single tile for small/odd H.  Production note: raise
    `cap` toward the per-generation VMEM budget (v7x has half of v6e's VMEM).
    """
    best = None
    for t in range(8, min(cap, ho // 2) + 1, 8):
        if ho % t == 0:
            best = t
    return best if best is not None else ho


def conv_block(x, weight, bias, kernel_size, stride,
               padding='same', activate=True):
    """x: (N, Cin, H, W) NCHW (PyTorch convention).
    weight: (Cout, Cin, KH, KW), bias: (Cout,).  Returns NCHW output."""
    kh, kw = kernel_size
    sh, sw = stride

    # ---- glue kept for drop-in parity with the nn.Module -------------------
    if padding == 'same':
        pad = kh - 1
        # F.pad(x, (0, 0, 0, pad)): pad H (second-to-last dim) at the bottom.
        x = jnp.pad(x, ((0, 0), (0, 0), (0, pad), (0, 0)))
    elif padding != 'valid':
        raise ValueError(padding)

    n, cin, hp, wp = x.shape
    cout = weight.shape[0]
    ho = (hp - kh) // sh + 1
    wo = (wp - kw) // sw + 1

    x_nhwc = jnp.transpose(x, (0, 2, 3, 1))                          # (N,Hp,Wp,Cin)
    w2d = jnp.transpose(weight, (2, 3, 1, 0)).reshape(kh * kw * cin, cout)
    b2d = bias.reshape(1, cout)

    tile_h = _pick_tile_h(ho)
    grid = (n, ho // tile_h)

    kernel = functools.partial(
        _convblock_kernel,
        tile_h=tile_h, wo=wo, cin=cin, cout=cout,
        kh=kh, kw=kw, sh=sh, sw=sw, activate=activate)

    out_nhwc = pl.pallas_call(
        kernel,
        out_shape=jax.ShapeDtypeStruct((n, ho, wo, cout), x.dtype),
        grid=grid,
        in_specs=[
            # Whole (padded) feature map of one batch element; its block index
            # only depends on b, so it stays resident across the inner H axis.
            pl.BlockSpec((1, hp, wp, cin), lambda b, h: (b, 0, 0, 0)),
            pl.BlockSpec((kh * kw * cin, cout), lambda b, h: (0, 0)),
            pl.BlockSpec((1, cout), lambda b, h: (0, 0)),
        ],
        out_specs=pl.BlockSpec((1, tile_h, wo, cout),
                               lambda b, h: (b, h, 0, 0)),
        compiler_params=pltpu.CompilerParams(
            dimension_semantics=("parallel", "parallel"),
            vmem_limit_bytes=32 * 1024 * 1024),
    )(x_nhwc, w2d, b2d)

    # Back to NCHW to match PyTorch.
    return jnp.transpose(out_nhwc, (0, 3, 1, 2))


def _reference(x, weight, bias, kernel_size, stride, padding, activate):
    """Pure-JAX reference for verification."""
    kh, _ = kernel_size
    if padding == 'same':
        x = jnp.pad(x, ((0, 0), (0, 0), (0, kh - 1), (0, 0)))
    out = jax.lax.conv_general_dilated(
        x, weight, window_strides=stride, padding='VALID',
        dimension_numbers=('NCHW', 'OIHW', 'NCHW'))
    out = out + bias.reshape(1, -1, 1, 1)
    if activate:
        out = jnp.where(out > 0, out, 0.2 * out)
    return out


if __name__ == "__main__":
    # Module config (small, consistent with ConvBlock(__init__) signature).
    in_channels, out_channels = 4, 8
    kernel_size = (3, 3)
    stride = (1, 1)
    padding = 'same'
    activate = True

    key = jax.random.PRNGKey(0)
    kx, kw_, kb = jax.random.split(key, 3)

    # Deterministic synthetic parameters (Conv2d shapes: OIHW weight, (O,) bias).
    x = jax.random.normal(kx, (2, in_channels, 16, 16), dtype=jnp.float32)
    fan_in = in_channels * kernel_size[0] * kernel_size[1]
    weight = jax.random.normal(
        kw_, (out_channels, in_channels, *kernel_size), dtype=jnp.float32)
    weight = weight * (1.0 / jnp.sqrt(fan_in))
    bias = jax.random.normal(kb, (out_channels,), dtype=jnp.float32) * 0.1

    out = conv_block(x, weight, bias, kernel_size, stride, padding, activate)
    out = jax.block_until_ready(out)

    ref = _reference(x, weight, bias, kernel_size, stride, padding, activate)
    assert out.shape == ref.shape, (out.shape, ref.shape)
    assert jnp.allclose(out, ref, rtol=1e-5, atol=1e-5), "mismatch vs reference"

    print("KERNEL_OK")
</pallas_src>

<mosaic_0001>
module attributes {stable_mosaic.version = 11 : i64} {
  func.func @_convblock_kernel(%arg0: i32, %arg1: i32, %arg2: memref<1x18x16x4xf32, #tpu.memory_space<vmem>>, %arg3: memref<36x8xf32, #tpu.memory_space<vmem>>, %arg4: memref<1x8xf32, #tpu.memory_space<vmem>>, %arg5: memref<1x8x14x8xf32, #tpu.memory_space<vmem>>) attributes {dimension_semantics = [#tpu.dimension_semantics<parallel>, #tpu.dimension_semantics<parallel>], iteration_bounds = array<i64: 2, 2>, scalar_prefetch = 0 : i64, scratch_operands = 0 : i64, tpu.core_type = #tpu.core_type<tc>, window_params = [{transform_indices = @transform_0, window_bounds = array<i64: 1, 18, 16, 4>}, {pipeline_mode = #tpu.pipeline_mode<synchronous>, transform_indices = @transform_1, window_bounds = array<i64: 36, 8>}, {pipeline_mode = #tpu.pipeline_mode<synchronous>, transform_indices = @transform_2, window_bounds = array<i64: 1, 8>}, {transform_indices = @transform_3, window_bounds = array<i64: 1, 8, 14, 8>}]} {
    %c8_i32 = arith.constant 8 : i32
    %0 = arith.muli %arg1, %c8_i32 : i32
    %1 = tpu.assume_multiple %0, 8 : i32
    %c0 = arith.constant 0 : index
    %2 = arith.index_cast %1 : i32 to index
    %c0_0 = arith.constant 0 : index
    %c0_1 = arith.constant 0 : index
    %3 = vector.load %arg2[%c0, %2, %c0_0, %c0_1] : memref<1x18x16x4xf32, #tpu.memory_space<vmem>>, vector<1x10x16x4xf32>
    %4 = vector.shape_cast %3 : vector<1x10x16x4xf32> to vector<10x16x4xf32>
    %5 = vector.extract_strided_slice %4 {offsets = [0, 0, 0], sizes = [8, 14, 4], strides = [1, 1, 1]} : vector<10x16x4xf32> to vector<8x14x4xf32>
    %6 = vector.extract_strided_slice %4 {offsets = [0, 1, 0], sizes = [8, 14, 4], strides = [1, 1, 1]} : vector<10x16x4xf32> to vector<8x14x4xf32>
    %7 = vector.extract_strided_slice %4 {offsets = [0, 2, 0], sizes = [8, 14, 4], strides = [1, 1, 1]} : vector<10x16x4xf32> to vector<8x14x4xf32>
    %8 = vector.extract_strided_slice %4 {offsets = [1, 0, 0], sizes = [8, 14, 4], strides = [1, 1, 1]} : vector<10x16x4xf32> to vector<8x14x4xf32>
    %9 = vector.extract_strided_slice %4 {offsets = [1, 1, 0], sizes = [8, 14, 4], strides = [1, 1, 1]} : vector<10x16x4xf32> to vector<8x14x4xf32>
    %10 = vector.extract_strided_slice %4 {offsets = [1, 2, 0], sizes = [8, 14, 4], strides = [1, 1, 1]} : vector<10x16x4xf32> to vector<8x14x4xf32>
    %11 = vector.extract_strided_slice %4 {offsets = [2, 0, 0], sizes = [8, 14, 4], strides = [1, 1, 1]} : vector<10x16x4xf32> to vector<8x14x4xf32>
    %12 = vector.extract_strided_slice %4 {offsets = [2, 1, 0], sizes = [8, 14, 4], strides = [1, 1, 1]} : vector<10x16x4xf32> to vector<8x14x4xf32>
    %13 = vector.extract_strided_slice %4 {offsets = [2, 2, 0], sizes = [8, 14, 4], strides = [1, 1, 1]} : vector<10x16x4xf32> to vector<8x14x4xf32>
    %14 = tpu.concatenate %5, %6, %7, %8, %9, %10, %11, %12, %13 in 2 : vector<8x14x4xf32>, vector<8x14x4xf32>, vector<8x14x4xf32>, vector<8x14x4xf32>, vector<8x14x4xf32>, vector<8x14x4xf32>, vector<8x14x4xf32>, vector<8x14x4xf32>, vector<8x14x4xf32> -> vector<8x14x36xf32>
    %15 = vector.shape_cast %14 : vector<8x14x36xf32> to vector<112x36xf32>
    %c0_2 = arith.constant 0 : index
    %c0_3 = arith.constant 0 : index
    %16 = vector.load %arg3[%c0_2, %c0_3] : memref<36x8xf32, #tpu.memory_space<vmem>>, vector<36x8xf32>
    %cst = arith.constant dense<0.000000e+00> : vector<112x8xf32>
    %17 = tpu.matmul %15, %16, %cst {dimension_numbers = #tpu.dot_dimension_numbers<[1], [0], [0], [1], [0, 0, 1, 1], [], []>} : vector<112x36xf32>, vector<36x8xf32>, vector<112x8xf32> -> vector<112x8xf32>
    %c0_4 = arith.constant 0 : index
    %c0_5 = arith.constant 0 : index
    %18 = vector.load %arg4[%c0_4, %c0_5] : memref<1x8xf32, #tpu.memory_space<vmem>>, vector<1x8xf32>
    %19 = vector.broadcast %18 : vector<1x8xf32> to vector<112x8xf32>
    %20 = arith.addf %17, %19 : vector<112x8xf32>
    %cst_6 = arith.constant 0.000000e+00 : f32
    %21 = vector.broadcast %cst_6 : f32 to vector<112x8xf32>
    %22 = arith.cmpf ogt, %20, %21 : vector<112x8xf32>
    %cst_7 = arith.constant 2.000000e-01 : f32
    %23 = vector.broadcast %cst_7 : f32 to vector<112x8xf32>
    %24 = arith.mulf %23, %20 : vector<112x8xf32>
    %25 = arith.select %22, %20, %24 : vector<112x8xi1>, vector<112x8xf32>
    %26 = vector.shape_cast %25 : vector<112x8xf32> to vector<8x14x8xf32>
    %c0_8 = arith.constant 0 : index
    %c0_9 = arith.constant 0 : index
    %c0_10 = arith.constant 0 : index
    %c0_11 = arith.constant 0 : index
    %27 = vector.load %arg5[%c0_8, %c0_9, %c0_10, %c0_11] : memref<1x8x14x8xf32, #tpu.memory_space<vmem>>, vector<1x8x14x8xf32>
    %28 = vector.shape_cast %27 : vector<1x8x14x8xf32> to vector<8x14x8xf32>
    %29 = vector.shape_cast %26 : vector<8x14x8xf32> to vector<1x8x14x8xf32>
    tpu.vector_store %arg5[%c0_8, %c0_9, %c0_10, %c0_11], %29 {strides = array<i32>} : memref<1x8x14x8xf32, #tpu.memory_space<vmem>>, vector<1x8x14x8xf32>,
    return
  }
  func.func @transform_0(%arg0: i32, %arg1: i32) -> (i32, i32, i32, i32) {
    %c0_i32 = arith.constant 0 : i32
    %c0_i32_0 = arith.constant 0 : i32
    %c0_i32_1 = arith.constant 0 : i32
    %c0_i32_2 = arith.constant 0 : i32
    return %arg0, %c0_i32, %c0_i32_0, %c0_i32_1 : i32, i32, i32, i32
  }
  func.func @transform_1(%arg0: i32, %arg1: i32) -> (i32, i32) {
    %c0_i32 = arith.constant 0 : i32
    %c0_i32_0 = arith.constant 0 : i32
    %c0_i32_1 = arith.constant 0 : i32
    return %c0_i32, %c0_i32_0 : i32, i32
  }
  func.func @transform_2(%arg0: i32, %arg1: i32) -> (i32, i32) {
    %c0_i32 = arith.constant 0 : i32
    %c0_i32_0 = arith.constant 0 : i32
    %c0_i32_1 = arith.constant 0 : i32
    return %c0_i32, %c0_i32_0 : i32, i32
  }
  func.func @transform_3(%arg0: i32, %arg1: i32) -> (i32, i32, i32, i32) {
    %c0_i32 = arith.constant 0 : i32
    %c0_i32_0 = arith.constant 0 : i32
    %c0_i32_1 = arith.constant 0 : i32
    return %arg0, %arg1, %c0_i32, %c0_i32_0 : i32, i32, i32, i32
  }
}

</mosaic_0001>

<llo_original>
// kernel: tpu_custom_call.1
$region0: #{tpu_custom_call.1}
  #allocation0 [shape = 'u32[]', space=smem, size = 0x4, offset = 0x4, fixed_abs, tag = 'smem constant byte address 0x4 - core index']
  #allocation1 [shape = 'u32[144,128]{1,0:T(1,128)}', space=vmem, size = 0x12000, scoped, tag = 'internal scratch']
  %s0 = inlined_call_operand.vmem [shape: f32[2,18,16,4], index: 0, kind: input, shape index: {}]
  %s1 = inlined_call_operand.vmem [shape: f32[36,8], index: 1, kind: input, shape index: {}]
  %s2 = inlined_call_operand.vmem [shape: f32[1,8], index: 2, kind: input, shape index: {}]
  %s3 = inlined_call_operand.vmem [shape: f32[2,16,14,8], index: 3, kind: output, shape index: {}]
  %s4 = sld [smem:[#allocation0]]
  $region45: #{tpu_custom_call.1} parent=0
    _
  %s6 = ssub.s32 1, %s4
  %s7 = scalar_select 0, %s6, %s4
  loop: start=0, step=1, limit=6
  $region2: #{tpu_custom_call.1} parent=0 // loop_pre_header
    _
  $region3: #{tpu_custom_call.1} parent=0 // loop_header
    %s9 = sphi 0, %s13
    %p10 = scmp.ge.s32.totalorder %s9, 6
    %s16 = sphi 0, %s28
    %s17 = sphi 0, %s24
    %s18 = sphi 0, %s16
    %s19 = sphi 0, %s17
    %s20 = sphi 0, %s18
    %s21 = sphi 0, %s19
    %s31 = sphi 0, %s33
    %s34 = sphi 0, %s31
    %s35 = sphi 0, %s34
    %s51 = sphi 0, %s35
    %s55 = sphi 0, %s55
    %s57 = sphi 0, %s55
    %s58 = sphi 0, %s57
    %s72 = sphi 0, %s58
    %s76 = sphi 0, %s76
    %s78 = sphi 0, %s76
    %s79 = sphi 0, %s78
    %s93 = sphi 0, %s79
    %s101 = sphi 0, %s103
    %s104 = sphi 0, %s101
    %s105 = sphi 0, %s104
    %s121 = sphi 0, %s105
  $region4: #{tpu_custom_call.1} parent=0 // loop_header_branch
    %12 = sbr.rel (%p10) target = $region8
  $region5: #{tpu_custom_call.1} parent=0 // loop_body
    %s14 = ssub.s32 %s9, 1
    %s15 = ssub.s32 %s9, 2
    %s22 = sadd.s32 1, %s17
    %p23 = scmp.ge.s32.totalorder %s22, 2
    %s24 = scalar_select %p23, 0, %s22
    %s25 = sadd.s32 1, %s16
    %s26 = scalar_select %p23, %s25, %s16
    %p27 = scmp.ge.s32.totalorder %s26, 2
    %s28 = scalar_select %p27, 0, %s26
    %s29 = ssub.s32 %s16, %s28
    %p30 = scmp.eq.s32.totalorder %s29, 0
    %s32 = sadd.s32 %s31, 1
    %s33 = scalar_select %p30, %s31, %s32
    %p36 = pneg %p30
    %p37 = scmp.eq.s32.totalorder %s9, 3
    %p38 = por %p36, %p37
    %p39 = scmp.ne.s32.totalorder %s31, %s34
    %p40 = scmp.eq.s32.totalorder %s9, 0
    %p41 = por %p39, %p40
    %p42 = scmp.ne.s32.totalorder %s31, %s34
    %p43 = scmp.eq.s32.totalorder %s14, 3
    %p44 = por %p42, %p43
    %p45 = scmp.ne.s32.totalorder %s34, %s35
    %p46 = scmp.eq.s32.totalorder %s14, 0
    %p47 = por %p45, %p46
    %p48 = scmp.ne.s32.totalorder %s34, %s35
    %p49 = scmp.eq.s32.totalorder %s15, 3
    %p50 = por %p48, %p49
    %p52 = scmp.ne.s32.totalorder %s35, %s51
    %p53 = scmp.eq.s32.totalorder %s15, 0
    %p54 = por %p52, %p53
    %s56 = sadd.s32 %s55, 1
    %p59 = scmp.eq.s32.totalorder %s9, 3
    %p60 = scmp.ne.s32.totalorder %s55, %s57
    %p61 = scmp.eq.s32.totalorder %s9, 0
    %p62 = por %p60, %p61
    %p63 = scmp.ne.s32.totalorder %s55, %s57
    %p64 = scmp.eq.s32.totalorder %s14, 3
    %p65 = por %p63, %p64
    %p66 = scmp.ne.s32.totalorder %s57, %s58
    %p67 = scmp.eq.s32.totalorder %s14, 0
    %p68 = por %p66, %p67
    %p69 = scmp.ne.s32.totalorder %s57, %s58
    %p70 = scmp.eq.s32.totalorder %s15, 3
    %p71 = por %p69, %p70
    %p73 = scmp.ne.s32.totalorder %s58, %s72
    %p74 = scmp.eq.s32.totalorder %s15, 0
    %p75 = por %p73, %p74
    %s77 = sadd.s32 %s76, 1
    %p80 = scmp.eq.s32.totalorder %s9, 3
    %p81 = scmp.ne.s32.totalorder %s76, %s78
    %p82 = scmp.eq.s32.totalorder %s9, 0
    %p83 = por %p81, %p82
    %p84 = scmp.ne.s32.totalorder %s76, %s78
    %p85 = scmp.eq.s32.totalorder %s14, 3
    %p86 = por %p84, %p85
    %p87 = scmp.ne.s32.totalorder %s78, %s79
    %p88 = scmp.eq.s32.totalorder %s14, 0
    %p89 = por %p87, %p88
    %p90 = scmp.ne.s32.totalorder %s78, %s79
    %p91 = scmp.eq.s32.totalorder %s15, 3
    %p92 = por %p90, %p91
    %p94 = scmp.ne.s32.totalorder %s79, %s93
    %p95 = scmp.eq.s32.totalorder %s15, 0
    %p96 = por %p94, %p95
    %s97 = ssub.s32 %s16, %s28
    %s98 = ssub.s32 %s17, %s24
    %s99 = sor.u32 %s97, %s98
    %p100 = scmp.eq.s32.totalorder %s99, 0
    %s102 = sadd.s32 %s101, 1
    %s103 = scalar_select %p100, %s101, %s102
    %p106 = pneg %p100
    %p107 = scmp.eq.s32.totalorder %s9, 3
    %p108 = por %p106, %p107
    %p109 = scmp.ne.s32.totalorder %s101, %s104
    %p110 = scmp.eq.s32.totalorder %s9, 0
    %p111 = por %p109, %p110
    %p112 = scmp.ne.s32.totalorder %s101, %s104
    %p113 = scmp.eq.s32.totalorder %s14, 3
    %p114 = por %p112, %p113
    %p115 = scmp.ne.s32.totalorder %s104, %s105
    %p116 = scmp.eq.s32.totalorder %s14, 0
    %p117 = por %p115, %p116
    %p118 = scmp.ne.s32.totalorder %s104, %s105
    %p119 = scmp.eq.s32.totalorder %s15, 3
    %p120 = por %p118, %p119
    %p122 = scmp.ne.s32.totalorder %s105, %s121
    %p123 = scmp.eq.s32.totalorder %s15, 0
    %p124 = por %p122, %p123
    %p125 = scmp.le.s32.totalorder 1, %s9
    %p126 = scmp.lt.s32.totalorder %s9, 5
    %p127 = pnand %p125, %p126
    %p128 = pneg %p127
    // Predicated region
    $region9: #{tpu_custom_call.1} parent=5 // pred_check
      _
    $region10: #{tpu_custom_call.1} parent=5 // pred_check_branch
      %130 = sbr.rel (%p127) target = $region12
    $region11: #{tpu_custom_call.1} parent=5 // pred_region
      %s131 = ssub.s32 %s9, 1
      // Predicated region
      $region13: #{tpu_custom_call.1} parent=11 // pred_check
        %p132 = pneg %p68
      $region14: #{tpu_custom_call.1} parent=11 // pred_check_branch
        %134 = sbr.rel (%p132) target = $region16
      $region15: #{tpu_custom_call.1} parent=11 // pred_region
        _
      $region16: #{tpu_custom_call.1} parent=11 // pred_fallthru
        _
      // Predicated region
      $region17: #{tpu_custom_call.1} parent=11 // pred_check
        %p135 = pneg %p89
      $region18: #{tpu_custom_call.1} parent=11 // pred_check_branch
        %137 = sbr.rel (%p135) target = $region20
      $region19: #{tpu_custom_call.1} parent=11 // pred_region
        _
      $region20: #{tpu_custom_call.1} parent=11 // pred_fallthru
        _
    $region12: #{tpu_custom_call.1} parent=5 // pred_fallthru
      _
    %p138 = scmp.lt.s32.totalorder %s9, 4
    // Predicated region
    $region21: #{tpu_custom_call.1} parent=5 // pred_check
      %p139 = pneg %p138
    $region22: #{tpu_custom_call.1} parent=5 // pred_check_branch
      %141 = sbr.rel (%p139) target = $region24
    $region23: #{tpu_custom_call.1} parent=5 // pred_region
      // Predicated region
      $region25: #{tpu_custom_call.1} parent=23 // pred_check
        %p142 = pneg %p41
      $region26: #{tpu_custom_call.1} parent=23 // pred_check_branch
        %144 = sbr.rel (%p142) target = $region28
      $region27: #{tpu_custom_call.1} parent=23 // pred_region
        %p145 = scmp.lt.s32.totalorder %s16, 1
        %s146 = scalar_select %p145, %s16, 1
        %s147 = smul.addr %s146, 36
        %s148 = smul.addr %s147, 8
        %s149 = scalar_lea.vmem %s0, %s148
      $region28: #{tpu_custom_call.1} parent=23 // pred_fallthru
        _
    $region24: #{tpu_custom_call.1} parent=5 // pred_fallthru
      _
    %p150 = scmp.le.s32.totalorder 1, %s9
    %p151 = scmp.lt.s32.totalorder %s9, 5
    %p152 = pnand %p150, %p151
    %p153 = pneg %p152
    // Predicated region
    $region29: #{tpu_custom_call.1} parent=5 // pred_check
      _
    $region30: #{tpu_custom_call.1} parent=5 // pred_check_branch
      %155 = sbr.rel (%p152) target = $region32
    $region31: #{tpu_custom_call.1} parent=5 // pred_region
      %s156 = ssub.s32 %s9, 1
      %p157 = scmp.lt.s32.totalorder %s18, 1
      %s158 = scalar_select %p157, %s18, 1
      %s159 = smul.addr %s158, 36
      %s160 = smul.addr %s159, 8
      %s161 = scalar_lea.vmem %s0, %s160
      %p162 = pneg %p47
      %p163 = pneg %p44
      %p164 = pneg %p68
      %p165 = pneg %p65
      %p166 = pneg %p89
      %p167 = pneg %p86
      %p168 = pneg %p117
      %p169 = pneg %p114
      %s170 = smul.u32 8, %s19
      %p171 = scmp.lt.s32.totalorder %s18, 1
      %s172 = scalar_select %p171, %s18, 1
      %p173 = scmp.lt.s32.totalorder %s170, 15
      %s174 = scalar_select %p173, %s170, 15
      %s175 = smul.addr %s174, 2
      %s176 = smul.addr %s172, 32
      %s177 = sadd.s32 %s175, %s176
      %s178 = smul.addr %s177, 8
      %s179 = scalar_lea.vmem %s3, %s178
      %p180 = scmp.lt.s32.totalorder %s18, 1
      %s181 = scalar_select %p180, %s18, 1
      %s182 = smul.addr %s181, 36
      %s183 = smul.addr %s182, 8
      %s184 = scalar_lea.vmem %s0, %s183
      %s185 = smul.u32 8, %s19
      %p186 = scmp.lt.s32.totalorder %s18, 1
      %s187 = scalar_select %p186, %s18, 1
      %p188 = scmp.lt.s32.totalorder %s185, 15
      %s189 = scalar_select %p188, %s185, 15
      %s190 = smul.addr %s189, 2
      %s191 = smul.addr %s187, 32
      %s192 = sadd.s32 %s190, %s191
      %s193 = smul.addr %s192, 8
      %s194 = scalar_lea.vmem %s3, %s193
      %s195 = smul.u32 8, %s19
      %s196 = smul.u32 %s19, 8
      %s197 = smul.u32 %s196, 16
      %s198 = scalar_lea.vmem %s184, %s197
      %v199 = vld [vmem:[%s198] sm:$0xff]
      %v200 = vld [vmem:[%s198 + $0x8] sm:$0xff]
      %v201 = vld [vmem:[%s198 + $0x10] sm:$0xff]
      %v202 = vld [vmem:[%s198 + $0x18] sm:$0xff]
      %v203 = vld [vmem:[%s198 + $0x20] sm:$0xff]
      %v204 = vld [vmem:[%s198 + $0x28] sm:$0xff]
      %v205 = vld [vmem:[%s198 + $0x30] sm:$0xff]
      %v206 = vld [vmem:[%s198 + $0x38] sm:$0xff]
      %v207 = vld [vmem:[%s198 + $0x40] sm:$0xff]
      %v208 = vld [vmem:[%s198 + $0x48] sm:$0xff]
      %v209 = vld [vmem:[%s198 + $0x50] sm:$0xff]
      %v210 = vld [vmem:[%s198 + $0x58] sm:$0xff]
      %v211 = vld [vmem:[%s198 + $0x60] sm:$0xff]
      %v212 = vld [vmem:[%s198 + $0x68] sm:$0xff]
      %v213 = vld [vmem:[%s198 + $0x70] sm:$0xff]
      %v214 = vld [vmem:[%s198 + $0x78] sm:$0xff]
      %v215 = vld [vmem:[%s198 + $0x80] sm:$0xff]
      %v216 = vld [vmem:[%s198 + $0x88] sm:$0xff]
      %v217 = vld [vmem:[%s198 + $0x90] sm:$0xff]
      %v218 = vld [vmem:[%s198 + $0x98] sm:$0xff]
      %vm235 = vcmask 1046528
      %v236 = vrot.slane %v199, 1
      %v237 = vrot.slane %v200, 1
      %v238 = vsel %vm235, %v236, %v237
      %v239 = vrot.slane %v201, 1
      %v240 = vrot.slane %v202, 1
      %v241 = vsel %vm235, %v239, %v240
      %v242 = vrot.slane %v203, 1
      %v243 = vrot.slane %v204, 1
      %v244 = vsel %vm235, %v242, %v243
      %v245 = vrot.slane %v205, 1
      %v246 = vrot.slane %v206, 1
      %v247 = vsel %vm235, %v245, %v246
      %v248 = vrot.slane %v207, 1
      %v249 = vrot.slane %v208, 1
      %v250 = vsel %vm235, %v248, %v249
      %v251 = vrot.slane %v209, 1
      %v252 = vrot.slane %v210, 1
      %v253 = vsel %vm235, %v251, %v252
      %v254 = vrot.slane %v211, 1
      %v255 = vrot.slane %v212, 1
      %v256 = vsel %vm235, %v254, %v255
      %v257 = vrot.slane %v213, 1
      %v258 = vrot.slane %v214, 1
      %v259 = vsel %vm235, %v257, %v258
      %260 = vrot.lane.b32.xlu0 %v238, 4
      %v261 = vpop.permute.xlu0 %260
      %262 = vrot.lane.b32.xlu0 %v237, 4
      %v263 = vpop.permute.xlu0 %262
      %264 = vrot.lane.b32.xlu0 %v241, 4
      %v265 = vpop.permute.xlu0 %264
      %266 = vrot.lane.b32.xlu0 %v240, 4
      %v267 = vpop.permute.xlu0 %266
      %268 = vrot.lane.b32.xlu0 %v244, 4
      %v269 = vpop.permute.xlu0 %268
      %270 = vrot.lane.b32.xlu0 %v243, 4
      %v271 = vpop.permute.xlu0 %270
      %272 = vrot.lane.b32.xlu0 %v247, 4
      %v273 = vpop.permute.xlu0 %272
      %274 = vrot.lane.b32.xlu0 %v246, 4
      %v275 = vpop.permute.xlu0 %274
      %276 = vrot.lane.b32.xlu0 %v250, 4
      %v277 = vpop.permute.xlu0 %276
      %278 = vrot.lane.b32.xlu0 %v249, 4
      %v279 = vpop.permute.xlu0 %278
      %280 = vrot.lane.b32.xlu0 %v253, 4
      %v281 = vpop.permute.xlu0 %280
      %282 = vrot.lane.b32.xlu0 %v252, 4
      %v283 = vpop.permute.xlu0 %282
      %284 = vrot.lane.b32.xlu0 %v256, 4
      %v285 = vpop.permute.xlu0 %284
      %286 = vrot.lane.b32.xlu0 %v255, 4
      %v287 = vpop.permute.xlu0 %286
      %288 = vrot.lane.b32.xlu0 %v259, 4
      %v289 = vpop.permute.xlu0 %288
      %290 = vrot.lane.b32.xlu0 %v258, 4
      %v291 = vpop.permute.xlu0 %290
      %vm308 = vcmask 1045504
      %v309 = vrot.slane %v199, 2
      %v310 = vrot.slane %v200, 2
      %v311 = vsel %vm308, %v309, %v310
      %v312 = vrot.slane %v201, 2
      %v313 = vrot.slane %v202, 2
      %v314 = vsel %vm308, %v312, %v313
      %v315 = vrot.slane %v203, 2
      %v316 = vrot.slane %v204, 2
      %v317 = vsel %vm308, %v315, %v316
      %v318 = vrot.slane %v205, 2
      %v319 = vrot.slane %v206, 2
      %v320 = vsel %vm308, %v318, %v319
      %v321 = vrot.slane %v207, 2
      %v322 = vrot.slane %v208, 2
      %v323 = vsel %vm308, %v321, %v322
      %v324 = vrot.slane %v209, 2
      %v325 = vrot.slane %v210, 2
      %v326 = vsel %vm308, %v324, %v325
      %v327 = vrot.slane %v211, 2
      %v328 = vrot.slane %v212, 2
      %v329 = vsel %vm308, %v327, %v328
      %v330 = vrot.slane %v213, 2
      %v331 = vrot.slane %v214, 2
      %v332 = vsel %vm308, %v330, %v331
      %333 = vrot.lane.b32.xlu0 %v311, 8
      %v334 = vpop.permute.xlu0 %333
      %335 = vrot.lane.b32.xlu0 %v310, 8
      %v336 = vpop.permute.xlu0 %335
      %337 = vrot.lane.b32.xlu0 %v314, 8
      %v338 = vpop.permute.xlu0 %337
      %339 = vrot.lane.b32.xlu0 %v313, 8
      %v340 = vpop.permute.xlu0 %339
      %341 = vrot.lane.b32.xlu0 %v317, 8
      %v342 = vpop.permute.xlu0 %341
      %343 = vrot.lane.b32.xlu0 %v316, 8
      %v344 = vpop.permute.xlu0 %343
      %345 = vrot.lane.b32.xlu0 %v320, 8
      %v346 = vpop.permute.xlu0 %345
      %347 = vrot.lane.b32.xlu0 %v319, 8
      %v348 = vpop.permute.xlu0 %347
      %349 = vrot.lane.b32.xlu0 %v323, 8
      %v350 = vpop.permute.xlu0 %349
      %351 = vrot.lane.b32.xlu0 %v322, 8
      %v352 = vpop.permute.xlu0 %351
      %353 = vrot.lane.b32.xlu0 %v326, 8
      %v354 = vpop.permute.xlu0 %353
      %355 = vrot.lane.b32.xlu0 %v325, 8
      %v356 = vpop.permute.xlu0 %355
      %357 = vrot.lane.b32.xlu0 %v329, 8
      %v358 = vpop.permute.xlu0 %357
      %359 = vrot.lane.b32.xlu0 %v328, 8
      %v360 = vpop.permute.xlu0 %359
      %361 = vrot.lane.b32.xlu0 %v332, 8
      %v362 = vpop.permute.xlu0 %361
      %363 = vrot.lane.b32.xlu0 %v331, 8
      %v364 = vpop.permute.xlu0 %363
      %383 = vrot.lane.b32.xlu0 %v201, 12
      %v384 = vpop.permute.xlu0 %383
      %385 = vrot.lane.b32.xlu0 %v202, 12
      %v386 = vpop.permute.xlu0 %385
      %387 = vrot.lane.b32.xlu0 %v203, 12
      %v388 = vpop.permute.xlu0 %387
      %389 = vrot.lane.b32.xlu0 %v204, 12
      %v390 = vpop.permute.xlu0 %389
      %391 = vrot.lane.b32.xlu0 %v205, 12
      %v392 = vpop.permute.xlu0 %391
      %393 = vrot.lane.b32.xlu0 %v206, 12
      %v394 = vpop.permute.xlu0 %393
      %395 = vrot.lane.b32.xlu0 %v207, 12
      %v396 = vpop.permute.xlu0 %395
      %397 = vrot.lane.b32.xlu0 %v208, 12
      %v398 = vpop.permute.xlu0 %397
      %399 = vrot.lane.b32.xlu0 %v209, 12
      %v400 = vpop.permute.xlu0 %399
      %401 = vrot.lane.b32.xlu0 %v210, 12
      %v402 = vpop.permute.xlu0 %401
      %403 = vrot.lane.b32.xlu0 %v211, 12
      %v404 = vpop.permute.xlu0 %403
      %405 = vrot.lane.b32.xlu0 %v212, 12
      %v406 = vpop.permute.xlu0 %405
      %407 = vrot.lane.b32.xlu0 %v213, 12
      %v408 = vpop.permute.xlu0 %407
      %409 = vrot.lane.b32.xlu0 %v214, 12
      %v410 = vpop.permute.xlu0 %409
      %411 = vrot.lane.b32.xlu0 %v215, 12
      %v412 = vpop.permute.xlu0 %411
      %413 = vrot.lane.b32.xlu0 %v216, 12
      %v414 = vpop.permute.xlu0 %413
      %v431 = vrot.slane %v215, 1
      %v432 = vrot.slane %v216, 1
      %v433 = vsel %vm235, %v431, %v432
      %434 = vrot.lane.b32.xlu0 %v241, 16
      %v435 = vpop.permute.xlu0 %434
      %436 = vrot.lane.b32.xlu0 %v240, 16
      %v437 = vpop.permute.xlu0 %436
      %438 = vrot.lane.b32.xlu0 %v244, 16
      %v439 = vpop.permute.xlu0 %438
      %440 = vrot.lane.b32.xlu0 %v243, 16
      %v441 = vpop.permute.xlu0 %440
      %442 = vrot.lane.b32.xlu0 %v247, 16
      %v443 = vpop.permute.xlu0 %442
      %444 = vrot.lane.b32.xlu0 %v246, 16
      %v445 = vpop.permute.xlu0 %444
      %446 = vrot.lane.b32.xlu0 %v250, 16
      %v447 = vpop.permute.xlu0 %446
      %448 = vrot.lane.b32.xlu0 %v249, 16
      %v449 = vpop.permute.xlu0 %448
      %450 = vrot.lane.b32.xlu0 %v253, 16
      %v451 = vpop.permute.xlu0 %450
      %452 = vrot.lane.b32.xlu0 %v252, 16
      %v453 = vpop.permute.xlu0 %452
      %454 = vrot.lane.b32.xlu0 %v256, 16
      %v455 = vpop.permute.xlu0 %454
      %456 = vrot.lane.b32.xlu0 %v255, 16
      %v457 = vpop.permute.xlu0 %456
      %458 = vrot.lane.b32.xlu0 %v259, 16
      %v459 = vpop.permute.xlu0 %458
      %460 = vrot.lane.b32.xlu0 %v258, 16
      %v461 = vpop.permute.xlu0 %460
      %462 = vrot.lane.b32.xlu0 %v433, 16
      %v463 = vpop.permute.xlu0 %462
      %464 = vrot.lane.b32.xlu0 %v432, 16
      %v465 = vpop.permute.xlu0 %464
      %v482 = vrot.slane %v215, 2
      %v483 = vrot.slane %v216, 2
      %v484 = vsel %vm308, %v482, %v483
      %485 = vrot.lane.b32.xlu0 %v314, 20
      %v486 = vpop.permute.xlu0 %485
      %487 = vrot.lane.b32.xlu0 %v313, 20
      %v488 = vpop.permute.xlu0 %487
      %489 = vrot.lane.b32.xlu0 %v317, 20
      %v490 = vpop.permute.xlu0 %489
      %491 = vrot.lane.b32.xlu0 %v316, 20
      %v492 = vpop.permute.xlu0 %491
      %493 = vrot.lane.b32.xlu0 %v320, 20
      %v494 = vpop.permute.xlu0 %493
      %495 = vrot.lane.b32.xlu0 %v319, 20
      %v496 = vpop.permute.xlu0 %495
      %497 = vrot.lane.b32.xlu0 %v323, 20
      %v498 = vpop.permute.xlu0 %497
      %499 = vrot.lane.b32.xlu0 %v322, 20
      %v500 = vpop.permute.xlu0 %499
      %501 = vrot.lane.b32.xlu0 %v326, 20
      %v502 = vpop.permute.xlu0 %501
      %503 = vrot.lane.b32.xlu0 %v325, 20
      %v504 = vpop.permute.xlu0 %503
      %505 = vrot.lane.b32.xlu0 %v329, 20
      %v506 = vpop.permute.xlu0 %505
      %507 = vrot.lane.b32.xlu0 %v328, 20
      %v508 = vpop.permute.xlu0 %507
      %509 = vrot.lane.b32.xlu0 %v332, 20
      %v510 = vpop.permute.xlu0 %509
      %511 = vrot.lane.b32.xlu0 %v331, 20
      %v512 = vpop.permute.xlu0 %511
      %513 = vrot.lane.b32.xlu0 %v484, 20
      %v514 = vpop.permute.xlu0 %513
      %515 = vrot.lane.b32.xlu0 %v483, 20
      %v516 = vpop.permute.xlu0 %515
      %535 = vrot.lane.b32.xlu0 %v203, 24
      %v536 = vpop.permute.xlu0 %535
      %537 = vrot.lane.b32.xlu0 %v204, 24
      %v538 = vpop.permute.xlu0 %537
      %539 = vrot.lane.b32.xlu0 %v205, 24
      %v540 = vpop.permute.xlu0 %539
      %541 = vrot.lane.b32.xlu0 %v206, 24
      %v542 = vpop.permute.xlu0 %541
      %543 = vrot.lane.b32.xlu0 %v207, 24
      %v544 = vpop.permute.xlu0 %543
      %545 = vrot.lane.b32.xlu0 %v208, 24
      %v546 = vpop.permute.xlu0 %545
      %547 = vrot.lane.b32.xlu0 %v209, 24
      %v548 = vpop.permute.xlu0 %547
      %549 = vrot.lane.b32.xlu0 %v210, 24
      %v550 = vpop.permute.xlu0 %549
      %551 = vrot.lane.b32.xlu0 %v211, 24
      %v552 = vpop.permute.xlu0 %551
      %553 = vrot.lane.b32.xlu0 %v212, 24
      %v554 = vpop.permute.xlu0 %553
      %555 = vrot.lane.b32.xlu0 %v213, 24
      %v556 = vpop.permute.xlu0 %555
      %557 = vrot.lane.b32.xlu0 %v214, 24
      %v558 = vpop.permute.xlu0 %557
      %559 = vrot.lane.b32.xlu0 %v215, 24
      %v560 = vpop.permute.xlu0 %559
      %561 = vrot.lane.b32.xlu0 %v216, 24
      %v562 = vpop.permute.xlu0 %561
      %563 = vrot.lane.b32.xlu0 %v217, 24
      %v564 = vpop.permute.xlu0 %563
      %565 = vrot.lane.b32.xlu0 %v218, 24
      %v566 = vpop.permute.xlu0 %565
      %v583 = vrot.slane %v217, 1
      %v584 = vrot.slane %v218, 1
      %v585 = vsel %vm235, %v583, %v584
      %586 = vrot.lane.b32.xlu0 %v244, 28
      %v587 = vpop.permute.xlu0 %586
      %588 = vrot.lane.b32.xlu0 %v243, 28
      %v589 = vpop.permute.xlu0 %588
      %590 = vrot.lane.b32.xlu0 %v247, 28
      %v591 = vpop.permute.xlu0 %590
      %592 = vrot.lane.b32.xlu0 %v246, 28
      %v593 = vpop.permute.xlu0 %592
      %594 = vrot.lane.b32.xlu0 %v250, 28
      %v595 = vpop.permute.xlu0 %594
      %596 = vrot.lane.b32.xlu0 %v249, 28
      %v597 = vpop.permute.xlu0 %596
      %598 = vrot.lane.b32.xlu0 %v253, 28
      %v599 = vpop.permute.xlu0 %598
      %600 = vrot.lane.b32.xlu0 %v252, 28
      %v601 = vpop.permute.xlu0 %600
      %602 = vrot.lane.b32.xlu0 %v256, 28
      %v603 = vpop.permute.xlu0 %602
      %604 = vrot.lane.b32.xlu0 %v255, 28
      %v605 = vpop.permute.xlu0 %604
      %606 = vrot.lane.b32.xlu0 %v259, 28
      %v607 = vpop.permute.xlu0 %606
      %608 = vrot.lane.b32.xlu0 %v258, 28
      %v609 = vpop.permute.xlu0 %608
      %610 = vrot.lane.b32.xlu0 %v433, 28
      %v611 = vpop.permute.xlu0 %610
      %612 = vrot.lane.b32.xlu0 %v432, 28
      %v613 = vpop.permute.xlu0 %612
      %614 = vrot.lane.b32.xlu0 %v585, 28
      %v615 = vpop.permute.xlu0 %614
      %616 = vrot.lane.b32.xlu0 %v584, 28
      %v617 = vpop.permute.xlu0 %616
      %v634 = vrot.slane %v217, 2
      %v635 = vrot.slane %v218, 2
      %v636 = vsel %vm308, %v634, %v635
      %637 = vrot.lane.b32.xlu0 %v317, 32
      %v638 = vpop.permute.xlu0 %637
      %639 = vrot.lane.b32.xlu0 %v316, 32
      %v640 = vpop.permute.xlu0 %639
      %641 = vrot.lane.b32.xlu0 %v320, 32
      %v642 = vpop.permute.xlu0 %641
      %643 = vrot.lane.b32.xlu0 %v319, 32
      %v644 = vpop.permute.xlu0 %643
      %645 = vrot.lane.b32.xlu0 %v323, 32
      %v646 = vpop.permute.xlu0 %645
      %647 = vrot.lane.b32.xlu0 %v322, 32
      %v648 = vpop.permute.xlu0 %647
      %649 = vrot.lane.b32.xlu0 %v326, 32
      %v650 = vpop.permute.xlu0 %649
      %651 = vrot.lane.b32.xlu0 %v325, 32
      %v652 = vpop.permute.xlu0 %651
      %653 = vrot.lane.b32.xlu0 %v329, 32
      %v654 = vpop.permute.xlu0 %653
      %655 = vrot.lane.b32.xlu0 %v328, 32
      %v656 = vpop.permute.xlu0 %655
      %657 = vrot.lane.b32.xlu0 %v332, 32
      %v658 = vpop.permute.xlu0 %657
      %659 = vrot.lane.b32.xlu0 %v331, 32
      %v660 = vpop.permute.xlu0 %659
      %661 = vrot.lane.b32.xlu0 %v484, 32
      %v662 = vpop.permute.xlu0 %661
      %663 = vrot.lane.b32.xlu0 %v483, 32
      %v664 = vpop.permute.xlu0 %663
      %665 = vrot.lane.b32.xlu0 %v636, 32
      %v666 = vpop.permute.xlu0 %665
      %667 = vrot.lane.b32.xlu0 %v635, 32
      %v668 = vpop.permute.xlu0 %667
      %vm685 = vcmask 31744
      %v686 = vsel %vm685, %v199, %v261
      %v687 = vsel %vm685, %v200, %v263
      %v688 = vsel %vm685, %v201, %v265
      %v689 = vsel %vm685, %v202, %v267
      %v690 = vsel %vm685, %v203, %v269
      %v691 = vsel %vm685, %v204, %v271
      %v692 = vsel %vm685, %v205, %v273
      %v693 = vsel %vm685, %v206, %v275
      %v694 = vsel %vm685, %v207, %v277
      %v695 = vsel %vm685, %v208, %v279
      %v696 = vsel %vm685, %v209, %v281
      %v697 = vsel %vm685, %v210, %v283
      %v698 = vsel %vm685, %v211, %v285
      %v699 = vsel %vm685, %v212, %v287
      %v700 = vsel %vm685, %v213, %v289
      %v701 = vsel %vm685, %v214, %v291
      %vm702 = vcmask 64512
      %v703 = vsel %vm702, %v686, %v334
      %v704 = vsel %vm702, %v687, %v336
      %v705 = vsel %vm702, %v688, %v338
      %v706 = vsel %vm702, %v689, %v340
      %v707 = vsel %vm702, %v690, %v342
      %v708 = vsel %vm702, %v691, %v344
      %v709 = vsel %vm702, %v692, %v346
      %v710 = vsel %vm702, %v693, %v348
      %v711 = vsel %vm702, %v694, %v350
      %v712 = vsel %vm702, %v695, %v352
      %v713 = vsel %vm702, %v696, %v354
      %v714 = vsel %vm702, %v697, %v356
      %v715 = vsel %vm702, %v698, %v358
      %v716 = vsel %vm702, %v699, %v360
      %v717 = vsel %vm702, %v700, %v362
      %v718 = vsel %vm702, %v701, %v364
      %vm719 = vcmask 97280
      %v720 = vsel %vm719, %v703, %v384
      %v721 = vsel %vm719, %v704, %v386
      %v722 = vsel %vm719, %v705, %v388
      %v723 = vsel %vm719, %v706, %v390
      %v724 = vsel %vm719, %v707, %v392
      %v725 = vsel %vm719, %v708, %v394
      %v726 = vsel %vm719, %v709, %v396
      %v727 = vsel %vm719, %v710, %v398
      %v728 = vsel %vm719, %v711, %v400
      %v729 = vsel %vm719, %v712, %v402
      %v730 = vsel %vm719, %v713, %v404
      %v731 = vsel %vm719, %v714, %v406
      %v732 = vsel %vm719, %v715, %v408
      %v733 = vsel %vm719, %v716, %v410
      %v734 = vsel %vm719, %v717, %v412
      %v735 = vsel %vm719, %v718, %v414
      %vm736 = vcmask 130048
      %v737 = vsel %vm736, %v720, %v435
      %v738 = vsel %vm736, %v721, %v437
      %v739 = vsel %vm736, %v722, %v439
      %v740 = vsel %vm736, %v723, %v441
      %v741 = vsel %vm736, %v724, %v443
      %v742 = vsel %vm736, %v725, %v445
      %v743 = vsel %vm736, %v726, %v447
      %v744 = vsel %vm736, %v727, %v449
      %v745 = vsel %vm736, %v728, %v451
      %v746 = vsel %vm736, %v729, %v453
      %v747 = vsel %vm736, %v730, %v455
      %v748 = vsel %vm736, %v731, %v457
      %v749 = vsel %vm736, %v732, %v459
      %v750 = vsel %vm736, %v733, %v461
      %v751 = vsel %vm736, %v734, %v463
      %v752 = vsel %vm736, %v735, %v465
      %vm753 = vcmask 162816
      %v754 = vsel %vm753, %v737, %v486
      %v755 = vsel %vm753, %v738, %v488
      %v756 = vsel %vm753, %v739, %v490
      %v757 = vsel %vm753, %v740, %v492
      %v758 = vsel %vm753, %v741, %v494
      %v759 = vsel %vm753, %v742, %v496
      %v760 = vsel %vm753, %v743, %v498
      %v761 = vsel %vm753, %v744, %v500
      %v762 = vsel %vm753, %v745, %v502
      %v763 = vsel %vm753, %v746, %v504
      %v764 = vsel %vm753, %v747, %v506
      %v765 = vsel %vm753, %v748, %v508
      %v766 = vsel %vm753, %v749, %v510
      %v767 = vsel %vm753, %v750, %v512
      %v768 = vsel %vm753, %v751, %v514
      %v769 = vsel %vm753, %v752, %v516
      %vm770 = vcmask 195584
      %v771 = vsel %vm770, %v754, %v536
      %v772 = vsel %vm770, %v755, %v538
      %v773 = vsel %vm770, %v756, %v540
      %v774 = vsel %vm770, %v757, %v542
      %v775 = vsel %vm770, %v758, %v544
      %v776 = vsel %vm770, %v759, %v546
      %v777 = vsel %vm770, %v760, %v548
      %v778 = vsel %vm770, %v761, %v550
      %v779 = vsel %vm770, %v762, %v552
      %v780 = vsel %vm770, %v763, %v554
      %v781 = vsel %vm770, %v764, %v556
      %v782 = vsel %vm770, %v765, %v558
      %v783 = vsel %vm770, %v766, %v560
      %v784 = vsel %vm770, %v767, %v562
      %v785 = vsel %vm770, %v768, %v564
      %v786 = vsel %vm770, %v769, %v566
      %vm787 = vcmask 228352
      %v788 = vsel %vm787, %v771, %v587
      %v789 = vsel %vm787, %v772, %v589
      %v790 = vsel %vm787, %v773, %v591
      %v791 = vsel %vm787, %v774, %v593
      %v792 = vsel %vm787, %v775, %v595
      %v793 = vsel %vm787, %v776, %v597
      %v794 = vsel %vm787, %v777, %v599
      %v795 = vsel %vm787, %v778, %v601
      %v796 = vsel %vm787, %v779, %v603
      %v797 = vsel %vm787, %v780, %v605
      %v798 = vsel %vm787, %v781, %v607
      %v799 = vsel %vm787, %v782, %v609
      %v800 = vsel %vm787, %v783, %v611
      %v801 = vsel %vm787, %v784, %v613
      %v802 = vsel %vm787, %v785, %v615
      %v803 = vsel %vm787, %v786, %v617
      %vm804 = vcmask 261120
      %v805 = vsel %vm804, %v788, %v638
      %v806 = vsel %vm804, %v789, %v640
      %v807 = vsel %vm804, %v790, %v642
      %v808 = vsel %vm804, %v791, %v644
      %v809 = vsel %vm804, %v792, %v646
      %v810 = vsel %vm804, %v793, %v648
      %v811 = vsel %vm804, %v794, %v650
      %v812 = vsel %vm804, %v795, %v652
      %v813 = vsel %vm804, %v796, %v654
      %v814 = vsel %vm804, %v797, %v656
      %v815 = vsel %vm804, %v798, %v658
      %v816 = vsel %vm804, %v799, %v660
      %v817 = vsel %vm804, %v800, %v662
      %v818 = vsel %vm804, %v801, %v664
      %v819 = vsel %vm804, %v802, %v666
      %v820 = vsel %vm804, %v803, %v668
      %v837 = vcombine.high %v805, %v805
      %v839 = vunpack.c.l.s4 1983009808
      %v840 = vunpack.c.0.s8 %v839
      %v841 = vlaneseq
      %v842 = vshrl.u32 %v841, 7
      %v843 = vsub.s32 %v840, %v842
      %v844 = vrot.slane %v805, %v843
      %v846 = vunpack.c.l.s4 1983009808
      %v847 = vunpack.c.0.s8 %v846
      %v848 = vlaneseq
      %v849 = vshrl.u32 %v848, 7
      %v850 = vsub.s32 %v847, %v849
      %v851 = vrot.slane %v837, %v850
      %v852 = vcombine.high %v844, %v844
      %v853 = vcombine.high %v851, %v851
      %v854 = vcombine.high %v806, %v806
      %v856 = vunpack.c.l.s4 1983009808
      %v857 = vunpack.c.0.s8 %v856
      %v858 = vlaneseq
      %v859 = vshrl.u32 %v858, 7
      %v860 = vsub.s32 %v857, %v859
      %v861 = vrot.slane %v806, %v860
      %v863 = vunpack.c.l.s4 1983009808
      %v864 = vunpack.c.0.s8 %v863
      %v865 = vlaneseq
      %v866 = vshrl.u32 %v865, 7
      %v867 = vsub.s32 %v864, %v866
      %v868 = vrot.slane %v854, %v867
      %v869 = vcombine.high %v861, %v861
      %v870 = vcombine.high %v807, %v807
      %v872 = vunpack.c.l.s4 1983009808
      %v873 = vunpack.c.0.s8 %v872
      %v874 = vlaneseq
      %v875 = vshrl.u32 %v874, 7
      %v876 = vsub.s32 %v873, %v875
      %v877 = vrot.slane %v807, %v876
      %v879 = vunpack.c.l.s4 1983009808
      %v880 = vunpack.c.0.s8 %v879
      %v881 = vlaneseq
      %v882 = vshrl.u32 %v881, 7
      %v883 = vsub.s32 %v880, %v882
      %v884 = vrot.slane %v870, %v883
      %v885 = vcombine.high %v877, %v877
      %v886 = vcombine.high %v884, %v884
      %v887 = vcombine.high %v808, %v808
      %v889 = vunpack.c.l.s4 1983009808
      %v890 = vunpack.c.0.s8 %v889
      %v891 = vlaneseq
      %v892 = vshrl.u32 %v891, 7
      %v893 = vsub.s32 %v890, %v892
      %v894 = vrot.slane %v808, %v893
      %v896 = vunpack.c.l.s4 1983009808
      %v897 = vunpack.c.0.s8 %v896
      %v898 = vlaneseq
      %v899 = vshrl.u32 %v898, 7
      %v900 = vsub.s32 %v897, %v899
      %v901 = vrot.slane %v887, %v900
      %v902 = vcombine.high %v894, %v894
      %v903 = vcombine.high %v809, %v809
      %v905 = vunpack.c.l.s4 1983009808
      %v906 = vunpack.c.0.s8 %v905
      %v907 = vlaneseq
      %v908 = vshrl.u32 %v907, 7
      %v909 = vsub.s32 %v906, %v908
      %v910 = vrot.slane %v809, %v909
      %v912 = vunpack.c.l.s4 1983009808
      %v913 = vunpack.c.0.s8 %v912
      %v914 = vlaneseq
      %v915 = vshrl.u32 %v914, 7
      %v916 = vsub.s32 %v913, %v915
      %v917 = vrot.slane %v903, %v916
      %v918 = vcombine.high %v910, %v910
      %v919 = vcombine.high %v917, %v917
      %v920 = vcombine.high %v810, %v810
      %v922 = vunpack.c.l.s4 1983009808
      %v923 = vunpack.c.0.s8 %v922
      %v924 = vlaneseq
      %v925 = vshrl.u32 %v924, 7
      %v926 = vsub.s32 %v923, %v925
      %v927 = vrot.slane %v810, %v926
      %v929 = vunpack.c.l.s4 1983009808
      %v930 = vunpack.c.0.s8 %v929
      %v931 = vlaneseq
      %v932 = vshrl.u32 %v931, 7
      %v933 = vsub.s32 %v930, %v932
      %v934 = vrot.slane %v920, %v933
      %v935 = vcombine.high %v927, %v927
      %v936 = vcombine.high %v811, %v811
      %v938 = vunpack.c.l.s4 1983009808
      %v939 = vunpack.c.0.s8 %v938
      %v940 = vlaneseq
      %v941 = vshrl.u32 %v940, 7
      %v942 = vsub.s32 %v939, %v941
      %v943 = vrot.slane %v811, %v942
      %v945 = vunpack.c.l.s4 1983009808
      %v946 = vunpack.c.0.s8 %v945
      %v947 = vlaneseq
      %v948 = vshrl.u32 %v947, 7
      %v949 = vsub.s32 %v946, %v948
      %v950 = vrot.slane %v936, %v949
      %v951 = vcombine.high %v943, %v943
      %v952 = vcombine.high %v950, %v950
      %v953 = vcombine.high %v812, %v812
      %v955 = vunpack.c.l.s4 1983009808
      %v956 = vunpack.c.0.s8 %v955
      %v957 = vlaneseq
      %v958 = vshrl.u32 %v957, 7
      %v959 = vsub.s32 %v956, %v958
      %v960 = vrot.slane %v812, %v959
      %v962 = vunpack.c.l.s4 1983009808
      %v963 = vunpack.c.0.s8 %v962
      %v964 = vlaneseq
      %v965 = vshrl.u32 %v964, 7
      %v966 = vsub.s32 %v963, %v965
      %v967 = vrot.slane %v953, %v966
      %v968 = vcombine.high %v960, %v960
      %v969 = vcombine.high %v813, %v813
      %v971 = vunpack.c.l.s4 1983009808
      %v972 = vunpack.c.0.s8 %v971
      %v973 = vlaneseq
      %v974 = vshrl.u32 %v973, 7
      %v975 = vsub.s32 %v972, %v974
      %v976 = vrot.slane %v813, %v975
      %v978 = vunpack.c.l.s4 1983009808
      %v979 = vunpack.c.0.s8 %v978
      %v980 = vlaneseq
      %v981 = vshrl.u32 %v980, 7
      %v982 = vsub.s32 %v979, %v981
      %v983 = vrot.slane %v969, %v982
      %v984 = vcombine.high %v976, %v976
      %v985 = vcombine.high %v983, %v983
      %v986 = vcombine.high %v814, %v814
      %v988 = vunpack.c.l.s4 1983009808
      %v989 = vunpack.c.0.s8 %v988
      %v990 = vlaneseq
      %v991 = vshrl.u32 %v990, 7
      %v992 = vsub.s32 %v989, %v991
      %v993 = vrot.slane %v814, %v992
      %v995 = vunpack.c.l.s4 1983009808
      %v996 = vunpack.c.0.s8 %v995
      %v997 = vlaneseq
      %v998 = vshrl.u32 %v997, 7
      %v999 = vsub.s32 %v996, %v998
      %v1000 = vrot.slane %v986, %v999
      %v1001 = vcombine.high %v993, %v993
      %v1002 = vcombine.high %v815, %v815
      %v1004 = vunpack.c.l.s4 1983009808
      %v1005 = vunpack.c.0.s8 %v1004
      %v1006 = vlaneseq
      %v1007 = vshrl.u32 %v1006, 7
      %v1008 = vsub.s32 %v1005, %v1007
      %v1009 = vrot.slane %v815, %v1008
      %v1011 = vunpack.c.l.s4 1983009808
      %v1012 = vunpack.c.0.s8 %v1011
      %v1013 = vlaneseq
      %v1014 = vshrl.u32 %v1013, 7
      %v1015 = vsub.s32 %v1012, %v1014
      %v1016 = vrot.slane %v1002, %v1015
      %v1017 = vcombine.high %v1009, %v1009
      %v1018 = vcombine.high %v1016, %v1016
      %v1019 = vcombine.high %v816, %v816
      %v1021 = vunpack.c.l.s4 1983009808
      %v1022 = vunpack.c.0.s8 %v1021
      %v1023 = vlaneseq
      %v1024 = vshrl.u32 %v1023, 7
      %v1025 = vsub.s32 %v1022, %v1024
      %v1026 = vrot.slane %v816, %v1025
      %v1028 = vunpack.c.l.s4 1983009808
      %v1029 = vunpack.c.0.s8 %v1028
      %v1030 = vlaneseq
      %v1031 = vshrl.u32 %v1030, 7
      %v1032 = vsub.s32 %v1029, %v1031
      %v1033 = vrot.slane %v1019, %v1032
      %v1034 = vcombine.high %v1026, %v1026
      %v1035 = vcombine.high %v817, %v817
      %v1037 = vunpack.c.l.s4 1983009808
      %v1038 = vunpack.c.0.s8 %v1037
      %v1039 = vlaneseq
      %v1040 = vshrl.u32 %v1039, 7
      %v1041 = vsub.s32 %v1038, %v1040
      %v1042 = vrot.slane %v817, %v1041
      %v1044 = vunpack.c.l.s4 1983009808
      %v1045 = vunpack.c.0.s8 %v1044
      %v1046 = vlaneseq
      %v1047 = vshrl.u32 %v1046, 7
      %v1048 = vsub.s32 %v1045, %v1047
      %v1049 = vrot.slane %v1035, %v1048
      %v1050 = vcombine.high %v1042, %v1042
      %v1051 = vcombine.high %v1049, %v1049
      %v1052 = vcombine.high %v818, %v818
      %v1054 = vunpack.c.l.s4 1983009808
      %v1055 = vunpack.c.0.s8 %v1054
      %v1056 = vlaneseq
      %v1057 = vshrl.u32 %v1056, 7
      %v1058 = vsub.s32 %v1055, %v1057
      %v1059 = vrot.slane %v818, %v1058
      %v1061 = vunpack.c.l.s4 1983009808
      %v1062 = vunpack.c.0.s8 %v1061
      %v1063 = vlaneseq
      %v1064 = vshrl.u32 %v1063, 7
      %v1065 = vsub.s32 %v1062, %v1064
      %v1066 = vrot.slane %v1052, %v1065
      %v1067 = vcombine.high %v1059, %v1059
      %v1068 = vcombine.high %v819, %v819
      %v1070 = vunpack.c.l.s4 1983009808
      %v1071 = vunpack.c.0.s8 %v1070
      %v1072 = vlaneseq
      %v1073 = vshrl.u32 %v1072, 7
      %v1074 = vsub.s32 %v1071, %v1073
      %v1075 = vrot.slane %v819, %v1074
      %v1077 = vunpack.c.l.s4 1983009808
      %v1078 = vunpack.c.0.s8 %v1077
      %v1079 = vlaneseq
      %v1080 = vshrl.u32 %v1079, 7
      %v1081 = vsub.s32 %v1078, %v1080
      %v1082 = vrot.slane %v1068, %v1081
      %v1083 = vcombine.high %v1075, %v1075
      %v1084 = vcombine.high %v1082, %v1082
      %v1085 = vcombine.high %v820, %v820
      %v1087 = vunpack.c.l.s4 1983009808
      %v1088 = vunpack.c.0.s8 %v1087
      %v1089 = vlaneseq
      %v1090 = vshrl.u32 %v1089, 7
      %v1091 = vsub.s32 %v1088, %v1090
      %v1092 = vrot.slane %v820, %v1091
      %v1094 = vunpack.c.l.s4 1983009808
      %v1095 = vunpack.c.0.s8 %v1094
      %v1096 = vlaneseq
      %v1097 = vshrl.u32 %v1096, 7
      %v1098 = vsub.s32 %v1095, %v1097
      %v1099 = vrot.slane %v1085, %v1098
      %v1100 = vcombine.high %v1092, %v1092
      %v1101 = vld [vmem:[%s1] sm:$0xff]
      %v1102 = vld [vmem:[%s1 + $0x8] sm:$0xff]
      %v1103 = vld [vmem:[%s1 + $0x10] sm:$0xff]
      %v1104 = vld [vmem:[%s1 + $0x18] sm:$0xff]
      %v1105 = vld [vmem:[%s1 + $0x20] sm:$0xf]
      %v1106 = vld [vmem:[%s2] sm:$0x1]
      %v1108 = vlaneseq
      %v1109 = vshrl.u32 %v1108, 7
      %v1110 = vsub.s32 0, %v1109
      %v1111 = vrot.slane %v1106, %v1110
      %v1113 = vcombine.low %v844, %v852
      %v1114 = vcombine.low %v851, %v853
      %v1116 = vunpack.c.l.s4 1983009808
      %v1117 = vunpack.c.0.s8 %v1116
      %v1118 = vlaneseq
      %v1119 = vshrl.u32 %v1118, 7
      %v1120 = vsub.s32 %v1117, %v1119
      %v1121 = vrot.slane %v1113, %v1120
      %v1123 = vunpack.c.l.s4 1983009808
      %v1124 = vunpack.c.0.s8 %v1123
      %v1125 = vlaneseq
      %v1126 = vshrl.u32 %v1125, 7
      %v1127 = vsub.s32 %v1124, %v1126
      %v1128 = vrot.slane %v1114, %v1127
      %v1129 = vcombine.low %v1121, %v1128
      %v1130 = vcombine.low %v861, %v869
      %v1131 = vcombine.low %v868, %v877
      %v1133 = vunpack.c.l.s4 1983009808
      %v1134 = vunpack.c.0.s8 %v1133
      %v1135 = vlaneseq
      %v1136 = vshrl.u32 %v1135, 7
      %v1137 = vsub.s32 %v1134, %v1136
      %v1138 = vrot.slane %v1130, %v1137
      %v1140 = vunpack.c.l.s4 1983009808
      %v1141 = vunpack.c.0.s8 %v1140
      %v1142 = vlaneseq
      %v1143 = vshrl.u32 %v1142, 7
      %v1144 = vsub.s32 %v1141, %v1143
      %v1145 = vrot.slane %v1131, %v1144
      %v1146 = vcombine.low %v1138, %v1145
      %v1147 = vcombine.low %v885, %v884
      %v1148 = vcombine.low %v886, %v894
      %v1150 = vunpack.c.l.s4 1983009808
      %v1151 = vunpack.c.0.s8 %v1150
      %v1152 = vlaneseq
      %v1153 = vshrl.u32 %v1152, 7
      %v1154 = vsub.s32 %v1151, %v1153
      %v1155 = vrot.slane %v1147, %v1154
      %v1157 = vunpack.c.l.s4 1983009808
      %v1158 = vunpack.c.0.s8 %v1157
      %v1159 = vlaneseq
      %v1160 = vshrl.u32 %v1159, 7
      %v1161 = vsub.s32 %v1158, %v1160
      %v1162 = vrot.slane %v1148, %v1161
      %v1163 = vcombine.low %v1155, %v1162
      %v1164 = vcombine.low %v902, %v901
      %v1165 = vcombine.low %v910, %v918
      %v1167 = vunpack.c.l.s4 1983009808
      %v1168 = vunpack.c.0.s8 %v1167
      %v1169 = vlaneseq
      %v1170 = vshrl.u32 %v1169, 7
      %v1171 = vsub.s32 %v1168, %v1170
      %v1172 = vrot.slane %v1164, %v1171
      %v1174 = vunpack.c.l.s4 1983009808
      %v1175 = vunpack.c.0.s8 %v1174
      %v1176 = vlaneseq
      %v1177 = vshrl.u32 %v1176, 7
      %v1178 = vsub.s32 %v1175, %v1177
      %v1179 = vrot.slane %v1165, %v1178
      %v1180 = vcombine.low %v1172, %v1179
      %v1181 = vcombine.low %v917, %v919
      %v1182 = vcombine.low %v927, %v935
      %v1184 = vunpack.c.l.s4 1983009808
      %v1185 = vunpack.c.0.s8 %v1184
      %v1186 = vlaneseq
      %v1187 = vshrl.u32 %v1186, 7
      %v1188 = vsub.s32 %v1185, %v1187
      %v1189 = vrot.slane %v1181, %v1188
      %v1191 = vunpack.c.l.s4 1983009808
      %v1192 = vunpack.c.0.s8 %v1191
      %v1193 = vlaneseq
      %v1194 = vshrl.u32 %v1193, 7
      %v1195 = vsub.s32 %v1192, %v1194
      %v1196 = vrot.slane %v1182, %v1195
      %v1197 = vcombine.low %v1189, %v1196
      %v1198 = vcombine.low %v934, %v943
      %v1199 = vcombine.low %v951, %v950
      %v1201 = vunpack.c.l.s4 1983009808
      %v1202 = vunpack.c.0.s8 %v1201
      %v1203 = vlaneseq
      %v1204 = vshrl.u32 %v1203, 7
      %v1205 = vsub.s32 %v1202, %v1204
      %v1206 = vrot.slane %v1198, %v1205
      %v1208 = vunpack.c.l.s4 1983009808
      %v1209 = vunpack.c.0.s8 %v1208
      %v1210 = vlaneseq
      %v1211 = vshrl.u32 %v1210, 7
      %v1212 = vsub.s32 %v1209, %v1211
      %v1213 = vrot.slane %v1199, %v1212
      %v1214 = vcombine.low %v1206, %v1213
      %v1215 = vcombine.low %v952, %v960
      %v1216 = vcombine.low %v968, %v967
      %v1218 = vunpack.c.l.s4 1983009808
      %v1219 = vunpack.c.0.s8 %v1218
      %v1220 = vlaneseq
      %v1221 = vshrl.u32 %v1220, 7
      %v1222 = vsub.s32 %v1219, %v1221
      %v1223 = vrot.slane %v1215, %v1222
      %v1225 = vunpack.c.l.s4 1983009808
      %v1226 = vunpack.c.0.s8 %v1225
      %v1227 = vlaneseq
      %v1228 = vshrl.u32 %v1227, 7
      %v1229 = vsub.s32 %v1226, %v1228
      %v1230 = vrot.slane %v1216, %v1229
      %v1231 = vcombine.low %v1223, %v1230
      %v1232 = vcombine.low %v976, %v984
      %v1233 = vcombine.low %v983, %v985
      %v1235 = vunpack.c.l.s4 1983009808
      %v1236 = vunpack.c.0.s8 %v1235
      %v1237 = vlaneseq
      %v1238 = vshrl.u32 %v1237, 7
      %v1239 = vsub.s32 %v1236, %v1238
      %v1240 = vrot.slane %v1232, %v1239
      %v1242 = vunpack.c.l.s4 1983009808
      %v1243 = vunpack.c.0.s8 %v1242
      %v1244 = vlaneseq
      %v1245 = vshrl.u32 %v1244, 7
      %v1246 = vsub.s32 %v1243, %v1245
      %v1247 = vrot.slane %v1233, %v1246
      %v1248 = vcombine.low %v1240, %v1247
      %v1249 = vcombine.low %v993, %v1001
      %v1250 = vcombine.low %v1000, %v1009
      %v1252 = vunpack.c.l.s4 1983009808
      %v1253 = vunpack.c.0.s8 %v1252
      %v1254 = vlaneseq
      %v1255 = vshrl.u32 %v1254, 7
      %v1256 = vsub.s32 %v1253, %v1255
      %v1257 = vrot.slane %v1249, %v1256
      %v1259 = vunpack.c.l.s4 1983009808
      %v1260 = vunpack.c.0.s8 %v1259
      %v1261 = vlaneseq
      %v1262 = vshrl.u32 %v1261, 7
      %v1263 = vsub.s32 %v1260, %v1262
      %v1264 = vrot.slane %v1250, %v1263
      %v1265 = vcombine.low %v1257, %v1264
      %v1266 = vcombine.low %v1017, %v1016
      %v1267 = vcombine.low %v1018, %v1026
      %v1269 = vunpack.c.l.s4 1983009808
      %v1270 = vunpack.c.0.s8 %v1269
      %v1271 = vlaneseq
      %v1272 = vshrl.u32 %v1271, 7
      %v1273 = vsub.s32 %v1270, %v1272
      %v1274 = vrot.slane %v1266, %v1273
      %v1276 = vunpack.c.l.s4 1983009808
      %v1277 = vunpack.c.0.s8 %v1276
      %v1278 = vlaneseq
      %v1279 = vshrl.u32 %v1278, 7
      %v1280 = vsub.s32 %v1277, %v1279
      %v1281 = vrot.slane %v1267, %v1280
      %v1282 = vcombine.low %v1274, %v1281
      %v1283 = vcombine.low %v1034, %v1033
      %v1284 = vcombine.low %v1042, %v1050
      %v1286 = vunpack.c.l.s4 1983009808
      %v1287 = vunpack.c.0.s8 %v1286
      %v1288 = vlaneseq
      %v1289 = vshrl.u32 %v1288, 7
      %v1290 = vsub.s32 %v1287, %v1289
      %v1291 = vrot.slane %v1283, %v1290
      %v1293 = vunpack.c.l.s4 1983009808
      %v1294 = vunpack.c.0.s8 %v1293
      %v1295 = vlaneseq
      %v1296 = vshrl.u32 %v1295, 7
      %v1297 = vsub.s32 %v1294, %v1296
      %v1298 = vrot.slane %v1284, %v1297
      %v1299 = vcombine.low %v1291, %v1298
      %v1300 = vcombine.low %v1049, %v1051
      %v1301 = vcombine.low %v1059, %v1067
      %v1303 = vunpack.c.l.s4 1983009808
      %v1304 = vunpack.c.0.s8 %v1303
      %v1305 = vlaneseq
      %v1306 = vshrl.u32 %v1305, 7
      %v1307 = vsub.s32 %v1304, %v1306
      %v1308 = vrot.slane %v1300, %v1307
      %v1310 = vunpack.c.l.s4 1983009808
      %v1311 = vunpack.c.0.s8 %v1310
      %v1312 = vlaneseq
      %v1313 = vshrl.u32 %v1312, 7
      %v1314 = vsub.s32 %v1311, %v1313
      %v1315 = vrot.slane %v1301, %v1314
      %v1316 = vcombine.low %v1308, %v1315
      %v1317 = vcombine.low %v1066, %v1075
      %v1318 = vcombine.low %v1083, %v1082
      %v1320 = vunpack.c.l.s4 1983009808
      %v1321 = vunpack.c.0.s8 %v1320
      %v1322 = vlaneseq
      %v1323 = vshrl.u32 %v1322, 7
      %v1324 = vsub.s32 %v1321, %v1323
      %v1325 = vrot.slane %v1317, %v1324
      %v1327 = vunpack.c.l.s4 1983009808
      %v1328 = vunpack.c.0.s8 %v1327
      %v1329 = vlaneseq
      %v1330 = vshrl.u32 %v1329, 7
      %v1331 = vsub.s32 %v1328, %v1330
      %v1332 = vrot.slane %v1318, %v1331
      %v1333 = vcombine.low %v1325, %v1332
      %v1334 = vcombine.low %v1084, %v1092
      %v1335 = vcombine.low %v1100, %v1099
      %v1337 = vunpack.c.l.s4 1983009808
      %v1338 = vunpack.c.0.s8 %v1337
      %v1339 = vlaneseq
      %v1340 = vshrl.u32 %v1339, 7
      %v1341 = vsub.s32 %v1338, %v1340
      %v1342 = vrot.slane %v1334, %v1341
      %v1344 = vunpack.c.l.s4 1983009808
      %v1345 = vunpack.c.0.s8 %v1344
      %v1346 = vlaneseq
      %v1347 = vshrl.u32 %v1346, 7
      %v1348 = vsub.s32 %v1345, %v1347
      %v1349 = vrot.slane %v1335, %v1348
      %v1350 = vcombine.low %v1342, %v1349
      %vm1351 = vcmask 293888
      %v1352 = vsel %vm1351, %v1129, 0
      %v1354 = vsel %vm1351, %v1146, 0
      %v1356 = vsel %vm1351, %v1163, 0
      %v1358 = vsel %vm1351, %v1180, 0
      %v1360 = vsel %vm1351, %v1197, 0
      %v1362 = vsel %vm1351, %v1214, 0
      %v1364 = vsel %vm1351, %v1231, 0
      %v1366 = vsel %vm1351, %v1248, 0
      %v1368 = vsel %vm1351, %v1265, 0
      %v1370 = vsel %vm1351, %v1282, 0
      %v1372 = vsel %vm1351, %v1299, 0
      %v1374 = vsel %vm1351, %v1316, 0
      %v1376 = vsel %vm1351, %v1333, 0
      %v1378 = vsel %vm1351, %v1350, 0
      %vm1380 = vcmask 1043456
      %v1382 = vsel %vm1380, %v1105, 0
      %1384 = vmatprep.subr.mxu0 0.0
      %1385 = vmatpush1.msra.mxu0 %v1101
      %1386 = vmatprep.subr.mxu0 0.0
      %1387 = vmatpush1.msra.mxu0 %v1102
      %1388 = vmatprep.subr.mxu0 0.0
      %1389 = vmatpush1.msra.mxu0 %v1103
      %1390 = vmatprep.subr.mxu0 0.0
      %1391 = vmatpush1.msra.mxu0 %v1104
      %1392 = vmatprep.subr.mxu0 0.0
      %1393 = vmatpush1.msra.mxu0 %v1382
      %1394 = vmatprep.subr.mxu0 0.0
      %1395 = vmatpush1.msra.mxu0 0.0
      %1396 = vmatprep.subr.mxu0 0.0
      %1397 = vmatpush1.msra.mxu0 0.0
      %1398 = vmatprep.subr.mxu0 0.0
      %1399 = vmatpush1.msra.mxu0 0.0
      %1400 = vmatprep.subr.mxu0 0.0
      %1401 = vmatpush1.msra.mxu0 0.0
      %1402 = vmatprep.subr.mxu0 0.0
      %1403 = vmatpush1.msra.mxu0 0.0
      %1404 = vmatprep.subr.mxu0 0.0
      %1405 = vmatpush1.msra.mxu0 0.0
      %1406 = vmatprep.subr.mxu0 0.0
      %1407 = vmatpush1.msra.mxu0 0.0
      %1408 = vmatprep.subr.mxu0 0.0
      %1409 = vmatpush1.msra.mxu0 0.0
      %1410 = vmatprep.subr.mxu0 0.0
      %1411 = vmatpush1.msra.mxu0 0.0
      %1412 = vmatprep.subr.mxu0 0.0
      %1413 = vmatpush1.msra.mxu0 0.0
      %1414 = vmatprep.subr.mxu0 0.0
      %1415 = vmatpush1.msra.mxu0 0.0
      %1416 = vmatprep.subr.mxu0 0.0
      %1417 = vmatpush1.msra.mxu0 0.0
      %1418 = vmatprep.subr.mxu0 0.0
      %1419 = vmatpush1.msra.mxu0 0.0
      %1420 = vmatprep.subr.mxu0 0.0
      %1421 = vmatpush1.msra.mxu0 0.0
      %1422 = vmatprep.subr.mxu0 0.0
      %1423 = vmatpush1.msra.mxu0 0.0
      %1424 = vmatprep.subr.mxu0 0.0
      %1425 = vmatpush1.msra.mxu0 0.0
      %1426 = vmatprep.subr.mxu0 0.0
      %1427 = vmatpush1.msra.mxu0 0.0
      %1428 = vmatprep.subr.mxu0 0.0
      %1429 = vmatpush1.msra.mxu0 0.0
      %1430 = vmatprep.subr.mxu0 0.0
      %1431 = vmatpush1.msra.mxu0 0.0
      %1432 = vmatprep.subr.mxu0 0.0
      %1433 = vmatpush1.msra.mxu0 0.0
      %1434 = vmatprep.subr.mxu0 0.0
      %1435 = vmatpush1.msra.mxu0 0.0
      %1436 = vmatprep.subr.mxu0 0.0
      %1437 = vmatpush1.msra.mxu0 0.0
      %1438 = vmatprep.subr.mxu0 0.0
      %1439 = vmatpush1.msra.mxu0 0.0
      %1440 = vmatprep.subr.mxu0 0.0
      %1441 = vmatpush1.msra.mxu0 0.0
      %1442 = vmatprep.subr.mxu0 0.0
      %1443 = vmatpush1.msra.mxu0 0.0
      %1444 = vmatprep.subr.mxu0 0.0
      %1445 = vmatpush1.msra.mxu0 0.0
      %1446 = vmatprep.subr.mxu0 0.0
      %1447 = vmatpush1.msra.mxu0 0.0
      %1448 = vmatprep.mubr.f32.mxu0 0.0
      %1449 = vmatmul.mubr.f32.gmra.mrb[0].mxu0 %v1352
      %v1450 = vpop.f32.mrb[0].mxu0
      %v1451 = vadd.f32 %v1111, %v1450
      %v1452 = vpop.f32.mrb[0].mxu0
      %1453 = vmatprep.mubr.f32.mxu0 0.0
      %1454 = vmatmul.mubr.f32.gmra.mrb[0].mxu0 %v1354
      %v1455 = vpop.f32.mrb[0].mxu0
      %v1456 = vadd.f32 %v1111, %v1455
      %v1457 = vpop.f32.mrb[0].mxu0
      %1458 = vmatprep.mubr.f32.mxu0 0.0
      %1459 = vmatmul.mubr.f32.gmra.mrb[0].mxu0 %v1356
      %v1460 = vpop.f32.mrb[0].mxu0
      %v1461 = vadd.f32 %v1111, %v1460
      %v1462 = vpop.f32.mrb[0].mxu0
      %1463 = vmatprep.mubr.f32.mxu0 0.0
      %1464 = vmatmul.mubr.f32.gmra.mrb[0].mxu0 %v1358
      %v1465 = vpop.f32.mrb[0].mxu0
      %v1466 = vadd.f32 %v1111, %v1465
      %v1467 = vpop.f32.mrb[0].mxu0
      %1468 = vmatprep.mubr.f32.mxu0 0.0
      %1469 = vmatmul.mubr.f32.gmra.mrb[0].mxu0 %v1360
      %v1470 = vpop.f32.mrb[0].mxu0
      %v1471 = vadd.f32 %v1111, %v1470
      %v1472 = vpop.f32.mrb[0].mxu0
      %1473 = vmatprep.mubr.f32.mxu0 0.0
      %1474 = vmatmul.mubr.f32.gmra.mrb[0].mxu0 %v1362
      %v1475 = vpop.f32.mrb[0].mxu0
      %v1476 = vadd.f32 %v1111, %v1475
      %v1477 = vpop.f32.mrb[0].mxu0
      %1478 = vmatprep.mubr.f32.mxu0 0.0
      %1479 = vmatmul.mubr.f32.gmra.mrb[0].mxu0 %v1364
      %v1480 = vpop.f32.mrb[0].mxu0
      %v1481 = vadd.f32 %v1111, %v1480
      %v1482 = vpop.f32.mrb[0].mxu0
      %1483 = vmatprep.mubr.f32.mxu0 0.0
      %1484 = vmatmul.mubr.f32.gmra.mrb[0].mxu0 %v1366
      %v1485 = vpop.f32.mrb[0].mxu0
      %v1486 = vadd.f32 %v1111, %v1485
      %v1487 = vpop.f32.mrb[0].mxu0
      %1488 = vmatprep.mubr.f32.mxu0 0.0
      %1489 = vmatmul.mubr.f32.gmra.mrb[0].mxu0 %v1368
      %v1490 = vpop.f32.mrb[0].mxu0
      %v1491 = vadd.f32 %v1111, %v1490
      %v1492 = vpop.f32.mrb[0].mxu0
      %1493 = vmatprep.mubr.f32.mxu0 0.0
      %1494 = vmatmul.mubr.f32.gmra.mrb[0].mxu0 %v1370
      %v1495 = vpop.f32.mrb[0].mxu0
      %v1496 = vadd.f32 %v1111, %v1495
      %v1497 = vpop.f32.mrb[0].mxu0
      %1498 = vmatprep.mubr.f32.mxu0 0.0
      %1499 = vmatmul.mubr.f32.gmra.mrb[0].mxu0 %v1372
      %v1500 = vpop.f32.mrb[0].mxu0
      %v1501 = vadd.f32 %v1111, %v1500
      %v1502 = vpop.f32.mrb[0].mxu0
      %1503 = vmatprep.mubr.f32.mxu0 0.0
      %1504 = vmatmul.mubr.f32.gmra.mrb[0].mxu0 %v1374
      %v1505 = vpop.f32.mrb[0].mxu0
      %v1506 = vadd.f32 %v1111, %v1505
      %v1507 = vpop.f32.mrb[0].mxu0
      %1508 = vmatprep.mubr.f32.mxu0 0.0
      %1509 = vmatmul.mubr.f32.gmra.mrb[0].mxu0 %v1376
      %v1510 = vpop.f32.mrb[0].mxu0
      %v1511 = vadd.f32 %v1111, %v1510
      %v1512 = vpop.f32.mrb[0].mxu0
      %1513 = vmatprep.mubr.f32.mxu0 0.0
      %1514 = vmatmul.mubr.f32.gmra.mrb[0].mxu0 %v1378
      %v1515 = vpop.f32.mrb[0].mxu0
      %v1516 = vadd.f32 %v1111, %v1515
      %v1517 = vpop.f32.mrb[0].mxu0
      %1518 = vdwg.mxu0
      %vm1519 = vcmp.gt.f32.partialorder %v1451, 0.0
      %vm1520 = vcmp.gt.f32.partialorder %v1456, 0.0
      %vm1521 = vcmp.gt.f32.partialorder %v1461, 0.0
      %vm1522 = vcmp.gt.f32.partialorder %v1466, 0.0
      %vm1523 = vcmp.gt.f32.partialorder %v1471, 0.0
      %vm1524 = vcmp.gt.f32.partialorder %v1476, 0.0
      %vm1525 = vcmp.gt.f32.partialorder %v1481, 0.0
      %vm1526 = vcmp.gt.f32.partialorder %v1486, 0.0
      %vm1527 = vcmp.gt.f32.partialorder %v1491, 0.0
      %vm1528 = vcmp.gt.f32.partialorder %v1496, 0.0
      %vm1529 = vcmp.gt.f32.partialorder %v1501, 0.0
      %vm1530 = vcmp.gt.f32.partialorder %v1506, 0.0
      %vm1531 = vcmp.gt.f32.partialorder %v1511, 0.0
      %vm1532 = vcmp.gt.f32.partialorder %v1516, 0.0
      %v1533 = vmul.f32 %v1451, 0.2
      %v1534 = vmul.f32 %v1456, 0.2
      %v1535 = vmul.f32 %v1461, 0.2
      %v1536 = vmul.f32 %v1466, 0.2
      %v1537 = vmul.f32 %v1471, 0.2
      %v1538 = vmul.f32 %v1476, 0.2
      %v1539 = vmul.f32 %v1481, 0.2
      %v1540 = vmul.f32 %v1486, 0.2
      %v1541 = vmul.f32 %v1491, 0.2
      %v1542 = vmul.f32 %v1496, 0.2
      %v1543 = vmul.f32 %v1501, 0.2
      %v1544 = vmul.f32 %v1506, 0.2
      %v1545 = vmul.f32 %v1511, 0.2
      %v1546 = vmul.f32 %v1516, 0.2
      %v1547 = vsel %vm1519, %v1451, %v1533
      %v1548 = vsel %vm1520, %v1456, %v1534
      %v1549 = vsel %vm1521, %v1461, %v1535
      %v1550 = vsel %vm1522, %v1466, %v1536
      %v1551 = vsel %vm1523, %v1471, %v1537
      %v1552 = vsel %vm1524, %v1476, %v1538
      %v1553 = vsel %vm1525, %v1481, %v1539
      %v1554 = vsel %vm1526, %v1486, %v1540
      %v1555 = vsel %vm1527, %v1491, %v1541
      %v1556 = vsel %vm1528, %v1496, %v1542
      %v1557 = vsel %vm1529, %v1501, %v1543
      %v1558 = vsel %vm1530, %v1506, %v1544
      %v1559 = vsel %vm1531, %v1511, %v1545
      %v1560 = vsel %vm1532, %v1516, %v1546
      %v1575 = vcombine.high %v1547, %v1547
      %v1577 = vunpack.c.l.s4 1983009808
      %v1578 = vunpack.c.0.s8 %v1577
      %v1579 = vlaneseq
      %v1580 = vshrl.u32 %v1579, 7
      %v1581 = vsub.s32 %v1578, %v1580
      %v1582 = vrot.slane %v1547, %v1581
      %v1584 = vunpack.c.l.s4 1983009808
      %v1585 = vunpack.c.0.s8 %v1584
      %v1586 = vlaneseq
      %v1587 = vshrl.u32 %v1586, 7
      %v1588 = vsub.s32 %v1585, %v1587
      %v1589 = vrot.slane %v1575, %v1588
      %v1590 = vcombine.high %v1582, %v1582
      %v1591 = vcombine.high %v1589, %v1589
      %v1592 = vcombine.high %v1548, %v1548
      %v1594 = vunpack.c.l.s4 1983009808
      %v1595 = vunpack.c.0.s8 %v1594
      %v1596 = vlaneseq
      %v1597 = vshrl.u32 %v1596, 7
      %v1598 = vsub.s32 %v1595, %v1597
      %v1599 = vrot.slane %v1548, %v1598
      %v1601 = vunpack.c.l.s4 1983009808
      %v1602 = vunpack.c.0.s8 %v1601
      %v1603 = vlaneseq
      %v1604 = vshrl.u32 %v1603, 7
      %v1605 = vsub.s32 %v1602, %v1604
      %v1606 = vrot.slane %v1592, %v1605
      %v1607 = vcombine.high %v1599, %v1599
      %v1608 = vcombine.high %v1606, %v1606
      %v1609 = vcombine.high %v1549, %v1549
      %v1611 = vunpack.c.l.s4 1983009808
      %v1612 = vunpack.c.0.s8 %v1611
      %v1613 = vlaneseq
      %v1614 = vshrl.u32 %v1613, 7
      %v1615 = vsub.s32 %v1612, %v1614
      %v1616 = vrot.slane %v1549, %v1615
      %v1618 = vunpack.c.l.s4 1983009808
      %v1619 = vunpack.c.0.s8 %v1618
      %v1620 = vlaneseq
      %v1621 = vshrl.u32 %v1620, 7
      %v1622 = vsub.s32 %v1619, %v1621
      %v1623 = vrot.slane %v1609, %v1622
      %v1624 = vcombine.high %v1616, %v1616
      %v1625 = vcombine.high %v1623, %v1623
      %v1626 = vcombine.high %v1550, %v1550
      %v1628 = vunpack.c.l.s4 1983009808
      %v1629 = vunpack.c.0.s8 %v1628
      %v1630 = vlaneseq
      %v1631 = vshrl.u32 %v1630, 7
      %v1632 = vsub.s32 %v1629, %v1631
      %v1633 = vrot.slane %v1550, %v1632
      %v1635 = vunpack.c.l.s4 1983009808
      %v1636 = vunpack.c.0.s8 %v1635
      %v1637 = vlaneseq
      %v1638 = vshrl.u32 %v1637, 7
      %v1639 = vsub.s32 %v1636, %v1638
      %v1640 = vrot.slane %v1626, %v1639
      %v1641 = vcombine.high %v1633, %v1633
      %v1642 = vcombine.high %v1640, %v1640
      %v1643 = vcombine.high %v1551, %v1551
      %v1645 = vunpack.c.l.s4 1983009808
      %v1646 = vunpack.c.0.s8 %v1645
      %v1647 = vlaneseq
      %v1648 = vshrl.u32 %v1647, 7
      %v1649 = vsub.s32 %v1646, %v1648
      %v1650 = vrot.slane %v1551, %v1649
      %v1652 = vunpack.c.l.s4 1983009808
      %v1653 = vunpack.c.0.s8 %v1652
      %v1654 = vlaneseq
      %v1655 = vshrl.u32 %v1654, 7
      %v1656 = vsub.s32 %v1653, %v1655
      %v1657 = vrot.slane %v1643, %v1656
      %v1658 = vcombine.high %v1650, %v1650
      %v1659 = vcombine.high %v1657, %v1657
      %v1660 = vcombine.high %v1552, %v1552
      %v1662 = vunpack.c.l.s4 1983009808
      %v1663 = vunpack.c.0.s8 %v1662
      %v1664 = vlaneseq
      %v1665 = vshrl.u32 %v1664, 7
      %v1666 = vsub.s32 %v1663, %v1665
      %v1667 = vrot.slane %v1552, %v1666
      %v1669 = vunpack.c.l.s4 1983009808
      %v1670 = vunpack.c.0.s8 %v1669
      %v1671 = vlaneseq
      %v1672 = vshrl.u32 %v1671, 7
      %v1673 = vsub.s32 %v1670, %v1672
      %v1674 = vrot.slane %v1660, %v1673
      %v1675 = vcombine.high %v1667, %v1667
      %v1676 = vcombine.high %v1674, %v1674
      %v1677 = vcombine.high %v1553, %v1553
      %v1679 = vunpack.c.l.s4 1983009808
      %v1680 = vunpack.c.0.s8 %v1679
      %v1681 = vlaneseq
      %v1682 = vshrl.u32 %v1681, 7
      %v1683 = vsub.s32 %v1680, %v1682
      %v1684 = vrot.slane %v1553, %v1683
      %v1686 = vunpack.c.l.s4 1983009808
      %v1687 = vunpack.c.0.s8 %v1686
      %v1688 = vlaneseq
      %v1689 = vshrl.u32 %v1688, 7
      %v1690 = vsub.s32 %v1687, %v1689
      %v1691 = vrot.slane %v1677, %v1690
      %v1692 = vcombine.high %v1684, %v1684
      %v1693 = vcombine.high %v1691, %v1691
      %v1694 = vcombine.high %v1554, %v1554
      %v1696 = vunpack.c.l.s4 1983009808
      %v1697 = vunpack.c.0.s8 %v1696
      %v1698 = vlaneseq
      %v1699 = vshrl.u32 %v1698, 7
      %v1700 = vsub.s32 %v1697, %v1699
      %v1701 = vrot.slane %v1554, %v1700
      %v1703 = vunpack.c.l.s4 1983009808
      %v1704 = vunpack.c.0.s8 %v1703
      %v1705 = vlaneseq
      %v1706 = vshrl.u32 %v1705, 7
      %v1707 = vsub.s32 %v1704, %v1706
      %v1708 = vrot.slane %v1694, %v1707
      %v1709 = vcombine.high %v1701, %v1701
      %v1710 = vcombine.high %v1708, %v1708
      %v1711 = vcombine.high %v1555, %v1555
      %v1713 = vunpack.c.l.s4 1983009808
      %v1714 = vunpack.c.0.s8 %v1713
      %v1715 = vlaneseq
      %v1716 = vshrl.u32 %v1715, 7
      %v1717 = vsub.s32 %v1714, %v1716
      %v1718 = vrot.slane %v1555, %v1717
      %v1720 = vunpack.c.l.s4 1983009808
      %v1721 = vunpack.c.0.s8 %v1720
      %v1722 = vlaneseq
      %v1723 = vshrl.u32 %v1722, 7
      %v1724 = vsub.s32 %v1721, %v1723
      %v1725 = vrot.slane %v1711, %v1724
      %v1726 = vcombine.high %v1718, %v1718
      %v1727 = vcombine.high %v1725, %v1725
      %v1728 = vcombine.high %v1556, %v1556
      %v1730 = vunpack.c.l.s4 1983009808
      %v1731 = vunpack.c.0.s8 %v1730
      %v1732 = vlaneseq
      %v1733 = vshrl.u32 %v1732, 7
      %v1734 = vsub.s32 %v1731, %v1733
      %v1735 = vrot.slane %v1556, %v1734
      %v1737 = vunpack.c.l.s4 1983009808
      %v1738 = vunpack.c.0.s8 %v1737
      %v1739 = vlaneseq
      %v1740 = vshrl.u32 %v1739, 7
      %v1741 = vsub.s32 %v1738, %v1740
      %v1742 = vrot.slane %v1728, %v1741
      %v1743 = vcombine.high %v1735, %v1735
      %v1744 = vcombine.high %v1742, %v1742
      %v1745 = vcombine.high %v1557, %v1557
      %v1747 = vunpack.c.l.s4 1983009808
      %v1748 = vunpack.c.0.s8 %v1747
      %v1749 = vlaneseq
      %v1750 = vshrl.u32 %v1749, 7
      %v1751 = vsub.s32 %v1748, %v1750
      %v1752 = vrot.slane %v1557, %v1751
      %v1754 = vunpack.c.l.s4 1983009808
      %v1755 = vunpack.c.0.s8 %v1754
      %v1756 = vlaneseq
      %v1757 = vshrl.u32 %v1756, 7
      %v1758 = vsub.s32 %v1755, %v1757
      %v1759 = vrot.slane %v1745, %v1758
      %v1760 = vcombine.high %v1752, %v1752
      %v1761 = vcombine.high %v1759, %v1759
      %v1762 = vcombine.high %v1558, %v1558
      %v1764 = vunpack.c.l.s4 1983009808
      %v1765 = vunpack.c.0.s8 %v1764
      %v1766 = vlaneseq
      %v1767 = vshrl.u32 %v1766, 7
      %v1768 = vsub.s32 %v1765, %v1767
      %v1769 = vrot.slane %v1558, %v1768
      %v1771 = vunpack.c.l.s4 1983009808
      %v1772 = vunpack.c.0.s8 %v1771
      %v1773 = vlaneseq
      %v1774 = vshrl.u32 %v1773, 7
      %v1775 = vsub.s32 %v1772, %v1774
      %v1776 = vrot.slane %v1762, %v1775
      %v1777 = vcombine.high %v1769, %v1769
      %v1778 = vcombine.high %v1776, %v1776
      %v1779 = vcombine.high %v1559, %v1559
      %v1781 = vunpack.c.l.s4 1983009808
      %v1782 = vunpack.c.0.s8 %v1781
      %v1783 = vlaneseq
      %v1784 = vshrl.u32 %v1783, 7
      %v1785 = vsub.s32 %v1782, %v1784
      %v1786 = vrot.slane %v1559, %v1785
      %v1788 = vunpack.c.l.s4 1983009808
      %v1789 = vunpack.c.0.s8 %v1788
      %v1790 = vlaneseq
      %v1791 = vshrl.u32 %v1790, 7
      %v1792 = vsub.s32 %v1789, %v1791
      %v1793 = vrot.slane %v1779, %v1792
      %v1794 = vcombine.high %v1786, %v1786
      %v1795 = vcombine.high %v1793, %v1793
      %v1796 = vcombine.high %v1560, %v1560
      %v1798 = vunpack.c.l.s4 1983009808
      %v1799 = vunpack.c.0.s8 %v1798
      %v1800 = vlaneseq
      %v1801 = vshrl.u32 %v1800, 7
      %v1802 = vsub.s32 %v1799, %v1801
      %v1803 = vrot.slane %v1560, %v1802
      %v1805 = vunpack.c.l.s4 1983009808
      %v1806 = vunpack.c.0.s8 %v1805
      %v1807 = vlaneseq
      %v1808 = vshrl.u32 %v1807, 7
      %v1809 = vsub.s32 %v1806, %v1808
      %v1810 = vrot.slane %v1796, %v1809
      %v1811 = vcombine.high %v1803, %v1803
      %v1812 = vcombine.high %v1810, %v1810
      %v1813 = vcombine.low %v1582, %v1590
      %v1814 = vcombine.low %v1589, %v1591
      %v1816 = vunpack.c.l.s4 1983009808
      %v1817 = vunpack.c.0.s8 %v1816
      %v1818 = vlaneseq
      %v1819 = vshrl.u32 %v1818, 7
      %v1820 = vsub.s32 %v1817, %v1819
      %v1821 = vrot.slane %v1813, %v1820
      %v1823 = vunpack.c.l.s4 1983009808
      %v1824 = vunpack.c.0.s8 %v1823
      %v1825 = vlaneseq
      %v1826 = vshrl.u32 %v1825, 7
      %v1827 = vsub.s32 %v1824, %v1826
      %v1828 = vrot.slane %v1814, %v1827
      %v1829 = vcombine.low %v1821, %v1828
      %v1830 = vcombine.low %v1599, %v1607
      %v1832 = vunpack.c.l.s4 1983009808
      %v1833 = vunpack.c.0.s8 %v1832
      %v1834 = vlaneseq
      %v1835 = vshrl.u32 %v1834, 7
      %v1836 = vsub.s32 %v1833, %v1835
      %v1837 = vrot.slane %v1830, %v1836
      %v1839 = vunpack.c.l.s4 1983009808
      %v1840 = vunpack.c.0.s8 %v1839
      %v1841 = vlaneseq
      %v1842 = vshrl.u32 %v1841, 7
      %v1843 = vsub.s32 %v1840, %v1842
      %v1844 = vrot.slane %v1606, %v1843
      %v1845 = vcombine.low %v1837, %v1844
      %v1846 = vcombine.low %v1608, %v1616
      %v1847 = vcombine.low %v1624, %v1623
      %v1849 = vunpack.c.l.s4 1983009808
      %v1850 = vunpack.c.0.s8 %v1849
      %v1851 = vlaneseq
      %v1852 = vshrl.u32 %v1851, 7
      %v1853 = vsub.s32 %v1850, %v1852
      %v1854 = vrot.slane %v1846, %v1853
      %v1856 = vunpack.c.l.s4 1983009808
      %v1857 = vunpack.c.0.s8 %v1856
      %v1858 = vlaneseq
      %v1859 = vshrl.u32 %v1858, 7
      %v1860 = vsub.s32 %v1857, %v1859
      %v1861 = vrot.slane %v1847, %v1860
      %v1862 = vcombine.low %v1854, %v1861
      %v1863 = vcombine.low %v1625, %v1633
      %v1865 = vunpack.c.l.s4 1983009808
      %v1866 = vunpack.c.0.s8 %v1865
      %v1867 = vlaneseq
      %v1868 = vshrl.u32 %v1867, 7
      %v1869 = vsub.s32 %v1866, %v1868
      %v1870 = vrot.slane %v1863, %v1869
      %v1872 = vunpack.c.l.s4 1983009808
      %v1873 = vunpack.c.0.s8 %v1872
      %v1874 = vlaneseq
      %v1875 = vshrl.u32 %v1874, 7
      %v1876 = vsub.s32 %v1873, %v1875
      %v1877 = vrot.slane %v1641, %v1876
      %v1878 = vcombine.low %v1870, %v1877
      %v1879 = vcombine.low %v1640, %v1642
      %v1880 = vcombine.low %v1650, %v1658
      %v1882 = vunpack.c.l.s4 1983009808
      %v1883 = vunpack.c.0.s8 %v1882
      %v1884 = vlaneseq
      %v1885 = vshrl.u32 %v1884, 7
      %v1886 = vsub.s32 %v1883, %v1885
      %v1887 = vrot.slane %v1879, %v1886
      %v1889 = vunpack.c.l.s4 1983009808
      %v1890 = vunpack.c.0.s8 %v1889
      %v1891 = vlaneseq
      %v1892 = vshrl.u32 %v1891, 7
      %v1893 = vsub.s32 %v1890, %v1892
      %v1894 = vrot.slane %v1880, %v1893
      %v1895 = vcombine.low %v1887, %v1894
      %v1896 = vcombine.low %v1657, %v1659
      %v1898 = vunpack.c.l.s4 1983009808
      %v1899 = vunpack.c.0.s8 %v1898
      %v1900 = vlaneseq
      %v1901 = vshrl.u32 %v1900, 7
      %v1902 = vsub.s32 %v1899, %v1901
      %v1903 = vrot.slane %v1896, %v1902
      %v1905 = vunpack.c.l.s4 1983009808
      %v1906 = vunpack.c.0.s8 %v1905
      %v1907 = vlaneseq
      %v1908 = vshrl.u32 %v1907, 7
      %v1909 = vsub.s32 %v1906, %v1908
      %v1910 = vrot.slane %v1667, %v1909
      %v1911 = vcombine.low %v1903, %v1910
      %v1912 = vcombine.low %v1675, %v1674
      %v1913 = vcombine.low %v1676, %v1684
      %v1915 = vunpack.c.l.s4 1983009808
      %v1916 = vunpack.c.0.s8 %v1915
      %v1917 = vlaneseq
      %v1918 = vshrl.u32 %v1917, 7
      %v1919 = vsub.s32 %v1916, %v1918
      %v1920 = vrot.slane %v1912, %v1919
      %v1922 = vunpack.c.l.s4 1983009808
      %v1923 = vunpack.c.0.s8 %v1922
      %v1924 = vlaneseq
      %v1925 = vshrl.u32 %v1924, 7
      %v1926 = vsub.s32 %v1923, %v1925
      %v1927 = vrot.slane %v1913, %v1926
      %v1928 = vcombine.low %v1920, %v1927
      %v1929 = vcombine.low %v1692, %v1691
      %v1931 = vunpack.c.l.s4 1983009808
      %v1932 = vunpack.c.0.s8 %v1931
      %v1933 = vlaneseq
      %v1934 = vshrl.u32 %v1933, 7
      %v1935 = vsub.s32 %v1932, %v1934
      %v1936 = vrot.slane %v1929, %v1935
      %v1938 = vunpack.c.l.s4 1983009808
      %v1939 = vunpack.c.0.s8 %v1938
      %v1940 = vlaneseq
      %v1941 = vshrl.u32 %v1940, 7
      %v1942 = vsub.s32 %v1939, %v1941
      %v1943 = vrot.slane %v1693, %v1942
      %v1944 = vcombine.low %v1936, %v1943
      %v1945 = vcombine.low %v1701, %v1709
      %v1946 = vcombine.low %v1708, %v1710
      %v1948 = vunpack.c.l.s4 1983009808
      %v1949 = vunpack.c.0.s8 %v1948
      %v1950 = vlaneseq
      %v1951 = vshrl.u32 %v1950, 7
      %v1952 = vsub.s32 %v1949, %v1951
      %v1953 = vrot.slane %v1945, %v1952
      %v1955 = vunpack.c.l.s4 1983009808
      %v1956 = vunpack.c.0.s8 %v1955
      %v1957 = vlaneseq
      %v1958 = vshrl.u32 %v1957, 7
      %v1959 = vsub.s32 %v1956, %v1958
      %v1960 = vrot.slane %v1946, %v1959
      %v1961 = vcombine.low %v1953, %v1960
      %v1962 = vcombine.low %v1718, %v1726
      %v1964 = vunpack.c.l.s4 1983009808
      %v1965 = vunpack.c.0.s8 %v1964
      %v1966 = vlaneseq
      %v1967 = vshrl.u32 %v1966, 7
      %v1968 = vsub.s32 %v1965, %v1967
      %v1969 = vrot.slane %v1962, %v1968
      %v1971 = vunpack.c.l.s4 1983009808
      %v1972 = vunpack.c.0.s8 %v1971
      %v1973 = vlaneseq
      %v1974 = vshrl.u32 %v1973, 7
      %v1975 = vsub.s32 %v1972, %v1974
      %v1976 = vrot.slane %v1725, %v1975
      %v1977 = vcombine.low %v1969, %v1976
      %v1978 = vcombine.low %v1727, %v1735
      %v1979 = vcombine.low %v1743, %v1742
      %v1981 = vunpack.c.l.s4 1983009808
      %v1982 = vunpack.c.0.s8 %v1981
      %v1983 = vlaneseq
      %v1984 = vshrl.u32 %v1983, 7
      %v1985 = vsub.s32 %v1982, %v1984
      %v1986 = vrot.slane %v1978, %v1985
      %v1988 = vunpack.c.l.s4 1983009808
      %v1989 = vunpack.c.0.s8 %v1988
      %v1990 = vlaneseq
      %v1991 = vshrl.u32 %v1990, 7
      %v1992 = vsub.s32 %v1989, %v1991
      %v1993 = vrot.slane %v1979, %v1992
      %v1994 = vcombine.low %v1986, %v1993
      %v1995 = vcombine.low %v1744, %v1752
      %v1997 = vunpack.c.l.s4 1983009808
      %v1998 = vunpack.c.0.s8 %v1997
      %v1999 = vlaneseq
      %v2000 = vshrl.u32 %v1999, 7
      %v2001 = vsub.s32 %v1998, %v2000
      %v2002 = vrot.slane %v1995, %v2001
      %v2004 = vunpack.c.l.s4 1983009808
      %v2005 = vunpack.c.0.s8 %v2004
      %v2006 = vlaneseq
      %v2007 = vshrl.u32 %v2006, 7
      %v2008 = vsub.s32 %v2005, %v2007
      %v2009 = vrot.slane %v1760, %v2008
      %v2010 = vcombine.low %v2002, %v2009
      %v2011 = vcombine.low %v1759, %v1761
      %v2012 = vcombine.low %v1769, %v1777
      %v2014 = vunpack.c.l.s4 1983009808
      %v2015 = vunpack.c.0.s8 %v2014
      %v2016 = vlaneseq
      %v2017 = vshrl.u32 %v2016, 7
      %v2018 = vsub.s32 %v2015, %v2017
      %v2019 = vrot.slane %v2011, %v2018
      %v2021 = vunpack.c.l.s4 1983009808
      %v2022 = vunpack.c.0.s8 %v2021
      %v2023 = vlaneseq
      %v2024 = vshrl.u32 %v2023, 7
      %v2025 = vsub.s32 %v2022, %v2024
      %v2026 = vrot.slane %v2012, %v2025
      %v2027 = vcombine.low %v2019, %v2026
      %v2028 = vcombine.low %v1776, %v1778
      %v2030 = vunpack.c.l.s4 1983009808
      %v2031 = vunpack.c.0.s8 %v2030
      %v2032 = vlaneseq
      %v2033 = vshrl.u32 %v2032, 7
      %v2034 = vsub.s32 %v2031, %v2033
      %v2035 = vrot.slane %v2028, %v2034
      %v2037 = vunpack.c.l.s4 1983009808
      %v2038 = vunpack.c.0.s8 %v2037
      %v2039 = vlaneseq
      %v2040 = vshrl.u32 %v2039, 7
      %v2041 = vsub.s32 %v2038, %v2040
      %v2042 = vrot.slane %v1786, %v2041
      %v2043 = vcombine.low %v2035, %v2042
      %v2044 = vcombine.low %v1794, %v1793
      %v2045 = vcombine.low %v1795, %v1803
      %v2047 = vunpack.c.l.s4 1983009808
      %v2048 = vunpack.c.0.s8 %v2047
      %v2049 = vlaneseq
      %v2050 = vshrl.u32 %v2049, 7
      %v2051 = vsub.s32 %v2048, %v2050
      %v2052 = vrot.slane %v2044, %v2051
      %v2054 = vunpack.c.l.s4 1983009808
      %v2055 = vunpack.c.0.s8 %v2054
      %v2056 = vlaneseq
      %v2057 = vshrl.u32 %v2056, 7
      %v2058 = vsub.s32 %v2055, %v2057
      %v2059 = vrot.slane %v2045, %v2058
      %v2060 = vcombine.low %v2052, %v2059
      %v2061 = vcombine.low %v1811, %v1810
      %v2063 = vunpack.c.l.s4 1983009808
      %v2064 = vunpack.c.0.s8 %v2063
      %v2065 = vlaneseq
      %v2066 = vshrl.u32 %v2065, 7
      %v2067 = vsub.s32 %v2064, %v2066
      %v2068 = vrot.slane %v2061, %v2067
      %v2070 = vunpack.c.l.s4 1983009808
      %v2071 = vunpack.c.0.s8 %v2070
      %v2072 = vlaneseq
      %v2073 = vshrl.u32 %v2072, 7
      %v2074 = vsub.s32 %v2071, %v2073
      %v2075 = vrot.slane %v1812, %v2074
      %v2076 = vcombine.low %v2068, %v2075
      %2093 = vst.msk [vmem:[%s194] sm:$0xff] %vm702, %v1829
      %vm2094 = vcmask 62464
      %2095 = vst.msk [vmem:[%s194 + $0x8] sm:$0x3f] %vm2094, %v1845
      %2096 = vst.msk [vmem:[%s194 + $0x10] sm:$0xff] %vm702, %v1862
      %2097 = vst.msk [vmem:[%s194 + $0x18] sm:$0x3f] %vm2094, %v1878
      %2098 = vst.msk [vmem:[%s194 + $0x20] sm:$0xff] %vm702, %v1895
      %2099 = vst.msk [vmem:[%s194 + $0x28] sm:$0x3f] %vm2094, %v1911
      %2100 = vst.msk [vmem:[%s194 + $0x30] sm:$0xff] %vm702, %v1928
      %2101 = vst.msk [vmem:[%s194 + $0x38] sm:$0x3f] %vm2094, %v1944
      %2102 = vst.msk [vmem:[%s194 + $0x40] sm:$0xff] %vm702, %v1961
      %2103 = vst.msk [vmem:[%s194 + $0x48] sm:$0x3f] %vm2094, %v1977
      %2104 = vst.msk [vmem:[%s194 + $0x50] sm:$0xff] %vm702, %v1994
      %2105 = vst.msk [vmem:[%s194 + $0x58] sm:$0x3f] %vm2094, %v2010
      %2106 = vst.msk [vmem:[%s194 + $0x60] sm:$0xff] %vm702, %v2027
      %2107 = vst.msk [vmem:[%s194 + $0x68] sm:$0x3f] %vm2094, %v2043
      %2108 = vst.msk [vmem:[%s194 + $0x70] sm:$0xff] %vm702, %v2060
      %2109 = vst.msk [vmem:[%s194 + $0x78] sm:$0x3f] %vm2094, %v2076
      %s2110 = smul.u32 8, %s19
      %p2111 = scmp.lt.s32.totalorder %s18, 1
      %s2112 = scalar_select %p2111, %s18, 1
      %p2113 = scmp.lt.s32.totalorder %s2110, 15
      %s2114 = scalar_select %p2113, %s2110, 15
      %s2115 = smul.addr %s2114, 2
      %s2116 = smul.addr %s2112, 32
      %s2117 = sadd.s32 %s2115, %s2116
      %s2118 = smul.addr %s2117, 8
      %s2119 = scalar_lea.vmem %s3, %s2118
      // Predicated region
      $region33: #{tpu_custom_call.1} parent=31 // pred_check
        %p2120 = pneg %p114
      $region34: #{tpu_custom_call.1} parent=31 // pred_check_branch
        %2122 = sbr.rel (%p2120) target = $region36
      $region35: #{tpu_custom_call.1} parent=31 // pred_region
        %s2123 = smul.u32 8, %s19
      $region36: #{tpu_custom_call.1} parent=31 // pred_fallthru
        _
    $region32: #{tpu_custom_call.1} parent=5 // pred_fallthru
      _
    %p2124 = scmp.le.s32.totalorder 2, %s9
    // Predicated region
    $region37: #{tpu_custom_call.1} parent=5 // pred_check
      %p2125 = pneg %p2124
    $region38: #{tpu_custom_call.1} parent=5 // pred_check_branch
      %2127 = sbr.rel (%p2125) target = $region40
    $region39: #{tpu_custom_call.1} parent=5 // pred_region
      %s2128 = ssub.s32 %s9, 2
      // Predicated region
      $region41: #{tpu_custom_call.1} parent=39 // pred_check
        %p2129 = pneg %p120
      $region42: #{tpu_custom_call.1} parent=39 // pred_check_branch
        %2131 = sbr.rel (%p2129) target = $region44
      $region43: #{tpu_custom_call.1} parent=39 // pred_region
        %s2132 = smul.u32 8, %s21
        %p2133 = scmp.lt.s32.totalorder %s20, 1
        %s2134 = scalar_select %p2133, %s20, 1
        %p2135 = scmp.lt.s32.totalorder %s2132, 15
        %s2136 = scalar_select %p2135, %s2132, 15
        %s2137 = smul.addr %s2136, 2
        %s2138 = smul.addr %s2134, 32
        %s2139 = sadd.s32 %s2137, %s2138
        %s2140 = smul.addr %s2139, 8
        %s2141 = scalar_lea.vmem %s3, %s2140
      $region44: #{tpu_custom_call.1} parent=39 // pred_fallthru
        _
    $region40: #{tpu_custom_call.1} parent=5 // pred_fallthru
      _
  $region6: #{tpu_custom_call.1} parent=0 // loop_footer
    %s13 = sadd.s32 1, %s9
  $region7: #{tpu_custom_call.1} parent=0 // loop_footer_branch
    %8 = sbr.rel target = $region3
  $region8: #{tpu_custom_call.1} parent=0 // loop_exit
    _

</llo_original>
